<compile_context>
chip_gen: v6e
topology: v6e:2x2x1
jax: 0.10.0
libtpu: 0.0.40
codegen_flags: <defaults>
</compile_context>

<pallas_src>
import functools

import jax
import jax.numpy as jnp
from jax import lax
from jax.experimental import pallas as pl
from jax.experimental.pallas import tpu as pltpu

_MIB = 1024 * 1024


def _self_attention_kernel(w_ref, v_ref, k_ref, q_ref, o_ref, *, scale, valid_s):
    # w_ref:       (3, Ep, Ep)  pre-transposed weights [Wv.T, Wk.T, Wq.T]
    # v/k/q/o_ref: (B_TILE, Sp, Ep)
    b_tile, s, ep = q_ref.shape
    rows = b_tile * s
    act_dtype = q_ref.dtype

    wv_t = w_ref[0]            # (Ep, Ep), already (in, out) layout
    wk_t = w_ref[1]
    wq_t = w_ref[2]

    # Flatten batch*seq so each projection is one big MXU matmul.  Sp is
    # sublane-aligned in the wrapper, so these reshapes are free views.
    v_in = v_ref[...].reshape(rows, ep)
    k_in = k_ref[...].reshape(rows, ep)
    q_in = q_ref[...].reshape(rows, ep)

    v = jnp.dot(v_in, wv_t, preferred_element_type=jnp.float32)
    k = jnp.dot(k_in, wk_t, preferred_element_type=jnp.float32)
    q = jnp.dot(q_in, wq_t, preferred_element_type=jnp.float32)

    # Keep the attention matmuls on the input-dtype MXU path (bf16-native on
    # v6e/v7x); this is a no-op cast for f32 inputs.
    v = v.astype(act_dtype).reshape(b_tile, s, ep)
    k = k.astype(act_dtype).reshape(b_tile, s, ep)
    q = q.astype(act_dtype).reshape(b_tile, s, ep)

    # Attention scores per batch: (B_TILE, S_q, S_k), accumulated in f32.
    scores = jnp.einsum("bqe,bke->bqk", q, k, preferred_element_type=jnp.float32)

    if valid_s != s:
        # Mask out zero-padded key rows so they do not enter the softmax.
        key_idx = lax.broadcasted_iota(jnp.int32, scores.shape, 2)
        scores = jnp.where(key_idx < valid_s, scores, -jnp.inf)

    # Numerically-stable softmax over the key axis; the denominator and the
    # post-softmax /sqrt(E) of the reference fold into one reciprocal (EUP).
    m = jnp.max(scores, axis=-1, keepdims=True)
    e = jnp.exp(scores - m)
    denom = jnp.sum(e, axis=-1, keepdims=True)
    attn = e * pl.reciprocal(denom * scale, approx=False)

    out = jnp.einsum("bqk,bke->bqe", attn.astype(act_dtype), v,
                     preferred_element_type=jnp.float32)
    o_ref[...] = out.astype(o_ref.dtype)


def _chip_config():
    """Per-generation VMEM budget / scoped limit / minimum grid steps."""
    kind = ""
    try:
        kind = jax.devices()[0].device_kind.lower()
    except Exception:
        pass
    if "v7" in kind:
        # 64 MiB VMEM per TensorCore, 2 TCs/chip: keep >= 2 batch grid steps
        # so dimension_semantics=("parallel",) can feed both cores.
        return {"budget": 24 * _MIB, "limit": 40 * _MIB, "min_steps": 2}
    if "v6" in kind:
        # 128 MiB VMEM, single TC: one big grid step is strictly better.
        return {"budget": 40 * _MIB, "limit": 64 * _MIB, "min_steps": 1}
    if "v5e" in kind or "v5 lite" in kind or "v5lite" in kind:
        # 128 MiB physical but 16 MiB scoped default: stay conservative.
        return {"budget": 12 * _MIB, "limit": 24 * _MIB, "min_steps": 1}
    # Unknown chip: conservative defaults.
    return {"budget": 12 * _MIB, "limit": 24 * _MIB, "min_steps": 1}


def _vmem_bytes(b_tile, s_pad, e_pad, itemsize, w_buffers=1):
    """Estimated VMEM footprint for one grid step at tile size b_tile."""
    act = 4 * 2 * b_tile * s_pad * e_pad * itemsize        # v/k/q/out blocks, 2 buffers
    weights = w_buffers * 3 * e_pad * e_pad * itemsize     # resident weight stack
    inter = 4 * b_tile * s_pad * e_pad * 4                 # f32 q/k/v/out intermediates
    inter += 3 * b_tile * s_pad * s_pad * 4                # f32 scores / exp / attn
    return act + weights + inter


def _pick_b_tile(n, s_pad, e_pad, itemsize, budget, min_steps):
    """Largest divisor of n fitting the VMEM budget and the grid-step policy."""
    best = 1
    for cand in range(2, n + 1):
        if n % cand:
            continue
        if n // cand < min_steps:
            break
        if _vmem_bytes(cand, s_pad, e_pad, itemsize) > budget:
            break
        best = cand
    return best


def self_attention(wv, wk, wq, values, keys, queries, *, b_tile=None):
    """values/keys/queries: (N, S, E); wv/wk/wq: (E, E) PyTorch-layout (out, in)."""
    n, s, e = queries.shape
    scale = float(e) ** 0.5
    dtype = queries.dtype
    itemsize = jnp.dtype(dtype).itemsize

    # Lane-dense embedding dim (multiple of 128) and sublane-aligned sequence
    # dim (8 for 4-byte, 16 for 2-byte dtypes) so every block load/store is an
    # unmasked full-tile access and the in-kernel reshape is a free view.
    e_pad = -(-e // 128) * 128
    s_mult = max(8, 32 // itemsize)
    s_pad = -(-s // s_mult) * s_mult

    def prep_w(w):  # PyTorch (out, in) -> transposed (in, out), zero-padded
        w_t = w.T.astype(dtype)
        if e_pad != e:
            w_t = jnp.pad(w_t, ((0, e_pad - e), (0, e_pad - e)))
        return w_t

    w_stack = jnp.stack([prep_w(wv), prep_w(wk), prep_w(wq)])  # (3, Ep, Ep)

    def prep_act(x):
        x = x.astype(dtype)
        if e_pad != e or s_pad != s:
            x = jnp.pad(x, ((0, 0), (0, s_pad - s), (0, e_pad - e)))
        return x

    values_p, keys_p, queries_p = prep_act(values), prep_act(keys), prep_act(queries)

    cfg = _chip_config()
    if b_tile is None:
        b_tile = _pick_b_tile(n, s_pad, e_pad, itemsize,
                              cfg["budget"], cfg["min_steps"])
    assert n % b_tile == 0, (n, b_tile)
    grid = (n // b_tile,)

    act_spec = pl.BlockSpec((b_tile, s_pad, e_pad), lambda b: (b, 0, 0))

    flops = n * (6 * s_pad * e_pad * e_pad + 4 * s_pad * s_pad * e_pad)
    bytes_accessed = itemsize * (4 * n * s_pad * e_pad + 3 * e_pad * e_pad)
    cost = pl.CostEstimate(flops=flops,
                           transcendentals=n * s_pad * s_pad,
                           bytes_accessed=bytes_accessed)

    kernel = functools.partial(_self_attention_kernel, scale=scale, valid_s=s)

    def launch(w_spec):
        return pl.pallas_call(
            kernel,
            out_shape=jax.ShapeDtypeStruct((n, s_pad, e_pad), dtype),
            grid_spec=pltpu.PrefetchScalarGridSpec(
                num_scalar_prefetch=0,
                grid=grid,
                in_specs=[w_spec, act_spec, act_spec, act_spec],
                out_specs=act_spec,
            ),
            compiler_params=pltpu.CompilerParams(
                dimension_semantics=("parallel",),
                vmem_limit_bytes=cfg["limit"],
            ),
            cost_estimate=cost,
        )(w_stack, values_p, keys_p, queries_p)

    try:
        # Grid-invariant weight stack: single-buffer it (the re-DMA is elided
        # anyway; a second buffer would only steal VMEM from B_TILE).
        out_padded = launch(pl.BlockSpec((3, e_pad, e_pad), lambda b: (0, 0, 0),
                                         pipeline_mode=pl.Buffered(1)))
    except Exception:
        # Fallback for Pallas builds without per-operand buffer control.
        out_padded = launch(pl.BlockSpec((3, e_pad, e_pad), lambda b: (0, 0, 0)))

    if s_pad != s or e_pad != e:
        return out_padded[:, :s, :e]
    return out_padded


def self_attention_ref(wv, wk, wq, values, keys, queries):
    """Pure-JAX reference mirroring the PyTorch forward exactly."""
    e = queries.shape[-1]
    v = jnp.einsum("nse,oe->nso", values, wv)
    k = jnp.einsum("nse,oe->nso", keys, wk)
    q = jnp.einsum("nse,oe->nso", queries, wq)
    dot = jnp.einsum("nqe,nke->nqk", q, k)
    dot = jax.nn.softmax(dot, axis=2)
    dot = dot / (float(e) ** 0.5)
    return jnp.einsum("nqk,nke->nqe", dot, v)


if __name__ == "__main__":
    key = jax.random.PRNGKey(0)
    N, S, E = 2, 8, 32  # batch, seq, embedding_size

    k_wv, k_wk, k_wq, k_v, k_k, k_q = jax.random.split(key, 6)

    # Deterministic parameter init (PyTorch nn.Linear-style uniform bound).
    bound = 1.0 / (E ** 0.5)
    wv = jax.random.uniform(k_wv, (E, E), jnp.float32, -bound, bound)
    wk = jax.random.uniform(k_wk, (E, E), jnp.float32, -bound, bound)
    wq = jax.random.uniform(k_wq, (E, E), jnp.float32, -bound, bound)

    values = jax.random.normal(k_v, (N, S, E), jnp.float32)
    keys = jax.random.normal(k_k, (N, S, E), jnp.float32)
    queries = jax.random.normal(k_q, (N, S, E), jnp.float32)

    out = self_attention(wv, wk, wq, values, keys, queries)
    out = jax.block_until_ready(out)

    ref = self_attention_ref(wv, wk, wq, values, keys, queries)
    assert out.shape == (N, S, E)
    assert jnp.allclose(out, ref, atol=1e-5, rtol=1e-5), "mismatch vs reference"

    print("KERNEL_OK")
</pallas_src>

<mosaic_0001>
module attributes {stable_mosaic.version = 11 : i64} {
  func.func @_self_attention_kernel(%arg0: i32, %arg1: memref<3x128x128xf32, #tpu.memory_space<vmem>>, %arg2: memref<2x8x128xf32, #tpu.memory_space<vmem>>, %arg3: memref<2x8x128xf32, #tpu.memory_space<vmem>>, %arg4: memref<2x8x128xf32, #tpu.memory_space<vmem>>, %arg5: memref<2x8x128xf32, #tpu.memory_space<vmem>>) attributes {dimension_semantics = [#tpu.dimension_semantics<parallel>], iteration_bounds = array<i64: 1>, scalar_prefetch = 0 : i64, scratch_operands = 0 : i64, tpu.core_type = #tpu.core_type<tc>, window_params = [{pipeline_mode = #tpu.pipeline_mode<synchronous>, transform_indices = @transform_0, window_bounds = array<i64: 3, 128, 128>}, {transform_indices = @transform_1, window_bounds = array<i64: 2, 8, 128>}, {transform_indices = @transform_2, window_bounds = array<i64: 2, 8, 128>}, {transform_indices = @transform_3, window_bounds = array<i64: 2, 8, 128>}, {transform_indices = @transform_4, window_bounds = array<i64: 2, 8, 128>}]} {
    %c0 = arith.constant 0 : index
    %c0_0 = arith.constant 0 : index
    %c0_1 = arith.constant 0 : index
    %0 = vector.load %arg1[%c0, %c0_0, %c0_1] : memref<3x128x128xf32, #tpu.memory_space<vmem>>, vector<1x128x128xf32>
    %1 = vector.shape_cast %0 : vector<1x128x128xf32> to vector<128x128xf32>
    %c1 = arith.constant 1 : index
    %c0_2 = arith.constant 0 : index
    %c0_3 = arith.constant 0 : index
    %2 = vector.load %arg1[%c1, %c0_2, %c0_3] : memref<3x128x128xf32, #tpu.memory_space<vmem>>, vector<1x128x128xf32>
    %3 = vector.shape_cast %2 : vector<1x128x128xf32> to vector<128x128xf32>
    %c2 = arith.constant 2 : index
    %c0_4 = arith.constant 0 : index
    %c0_5 = arith.constant 0 : index
    %4 = vector.load %arg1[%c2, %c0_4, %c0_5] : memref<3x128x128xf32, #tpu.memory_space<vmem>>, vector<1x128x128xf32>
    %5 = vector.shape_cast %4 : vector<1x128x128xf32> to vector<128x128xf32>
    %c0_6 = arith.constant 0 : index
    %c0_7 = arith.constant 0 : index
    %c0_8 = arith.constant 0 : index
    %6 = vector.load %arg2[%c0_6, %c0_7, %c0_8] : memref<2x8x128xf32, #tpu.memory_space<vmem>>, vector<2x8x128xf32>
    %7 = vector.shape_cast %6 : vector<2x8x128xf32> to vector<16x128xf32>
    %c0_9 = arith.constant 0 : index
    %c0_10 = arith.constant 0 : index
    %c0_11 = arith.constant 0 : index
    %8 = vector.load %arg3[%c0_9, %c0_10, %c0_11] : memref<2x8x128xf32, #tpu.memory_space<vmem>>, vector<2x8x128xf32>
    %9 = vector.shape_cast %8 : vector<2x8x128xf32> to vector<16x128xf32>
    %c0_12 = arith.constant 0 : index
    %c0_13 = arith.constant 0 : index
    %c0_14 = arith.constant 0 : index
    %10 = vector.load %arg4[%c0_12, %c0_13, %c0_14] : memref<2x8x128xf32, #tpu.memory_space<vmem>>, vector<2x8x128xf32>
    %11 = vector.shape_cast %10 : vector<2x8x128xf32> to vector<16x128xf32>
    %cst = arith.constant dense<0.000000e+00> : vector<16x128xf32>
    %12 = tpu.matmul %7, %1, %cst {dimension_numbers = #tpu.dot_dimension_numbers<[1], [0], [0], [1], [0, 0, 1, 1], [], []>} : vector<16x128xf32>, vector<128x128xf32>, vector<16x128xf32> -> vector<16x128xf32>
    %cst_15 = arith.constant dense<0.000000e+00> : vector<16x128xf32>
    %13 = tpu.matmul %9, %3, %cst_15 {dimension_numbers = #tpu.dot_dimension_numbers<[1], [0], [0], [1], [0, 0, 1, 1], [], []>} : vector<16x128xf32>, vector<128x128xf32>, vector<16x128xf32> -> vector<16x128xf32>
    %cst_16 = arith.constant dense<0.000000e+00> : vector<16x128xf32>
    %14 = tpu.matmul %11, %5, %cst_16 {dimension_numbers = #tpu.dot_dimension_numbers<[1], [0], [0], [1], [0, 0, 1, 1], [], []>} : vector<16x128xf32>, vector<128x128xf32>, vector<16x128xf32> -> vector<16x128xf32>
    %15 = vector.shape_cast %12 : vector<16x128xf32> to vector<2x8x128xf32>
    %16 = vector.shape_cast %13 : vector<16x128xf32> to vector<2x8x128xf32>
    %17 = vector.shape_cast %14 : vector<16x128xf32> to vector<2x8x128xf32>
    "tpu.trace_start"() <{level = 10 : i32, message = "bqe,bke->bqk"}> : () -> ()
    %cst_17 = arith.constant dense<0.000000e+00> : vector<2x8x8xf32>
    %18 = tpu.matmul %17, %16, %cst_17 {dimension_numbers = #tpu.dot_dimension_numbers<[2], [2], [1], [1], [0, 0, 0, 1, 1, 1], [0], [0]>} : vector<2x8x128xf32>, vector<2x8x128xf32>, vector<2x8x8xf32> -> vector<2x8x8xf32>
    "tpu.trace_stop"() : () -> ()
    %cst_18 = arith.constant dense<0xFF800000> : vector<2x8xf32>
    %19 = vector.multi_reduction <maximumf>, %18, %cst_18 [2] : vector<2x8x8xf32> to vector<2x8xf32>
    %20 = vector.shape_cast %19 : vector<2x8xf32> to vector<2x8x1xf32>
    %21 = vector.broadcast %20 : vector<2x8x1xf32> to vector<2x8x8xf32>
    %22 = arith.subf %18, %21 : vector<2x8x8xf32>
    %23 = math.exp %22 : vector<2x8x8xf32>
    %cst_19 = arith.constant dense<0.000000e+00> : vector<2x8xf32>
    %24 = vector.multi_reduction <add>, %23, %cst_19 [2] : vector<2x8x8xf32> to vector<2x8xf32>
    %25 = vector.shape_cast %24 : vector<2x8xf32> to vector<2x8x1xf32>
    %cst_20 = arith.constant 5.65685415 : f32
    %26 = vector.broadcast %cst_20 : f32 to vector<2x8x1xf32>
    %27 = arith.mulf %25, %26 : vector<2x8x1xf32>
    %28 = tpu.reciprocal %27 : vector<2x8x1xf32> -> vector<2x8x1xf32>
    %29 = vector.broadcast %28 : vector<2x8x1xf32> to vector<2x8x8xf32>
    %30 = arith.mulf %23, %29 : vector<2x8x8xf32>
    "tpu.trace_start"() <{level = 10 : i32, message = "bqk,bke->bqe"}> : () -> ()
    %cst_21 = arith.constant dense<0.000000e+00> : vector<2x8x128xf32>
    %31 = tpu.matmul %30, %15, %cst_21 {dimension_numbers = #tpu.dot_dimension_numbers<[2], [1], [1], [2], [0, 0, 0, 1, 1, 2], [0], [0]>} : vector<2x8x8xf32>, vector<2x8x128xf32>, vector<2x8x128xf32> -> vector<2x8x128xf32>
    "tpu.trace_stop"() : () -> ()
    %c0_22 = arith.constant 0 : index
    %c0_23 = arith.constant 0 : index
    %c0_24 = arith.constant 0 : index
    %32 = vector.load %arg5[%c0_22, %c0_23, %c0_24] : memref<2x8x128xf32, #tpu.memory_space<vmem>>, vector<2x8x128xf32>
    tpu.vector_store %arg5[%c0_22, %c0_23, %c0_24], %31 {strides = array<i32>} : memref<2x8x128xf32, #tpu.memory_space<vmem>>, vector<2x8x128xf32>,
    return
  }
  func.func @transform_0(%arg0: i32) -> (i32, i32, i32) {
    %c0_i32 = arith.constant 0 : i32
    %c0_i32_0 = arith.constant 0 : i32
    %c0_i32_1 = arith.constant 0 : i32
    %c0_i32_2 = arith.constant 0 : i32
    return %c0_i32, %c0_i32_0, %c0_i32_1 : i32, i32, i32
  }
  func.func @transform_1(%arg0: i32) -> (i32, i32, i32) {
    %c0_i32 = arith.constant 0 : i32
    %c0_i32_0 = arith.constant 0 : i32
    %c0_i32_1 = arith.constant 0 : i32
    return %arg0, %c0_i32, %c0_i32_0 : i32, i32, i32
  }
  func.func @transform_2(%arg0: i32) -> (i32, i32, i32) {
    %c0_i32 = arith.constant 0 : i32
    %c0_i32_0 = arith.constant 0 : i32
    %c0_i32_1 = arith.constant 0 : i32
    return %arg0, %c0_i32, %c0_i32_0 : i32, i32, i32
  }
  func.func @transform_3(%arg0: i32) -> (i32, i32, i32) {
    %c0_i32 = arith.constant 0 : i32
    %c0_i32_0 = arith.constant 0 : i32
    %c0_i32_1 = arith.constant 0 : i32
    return %arg0, %c0_i32, %c0_i32_0 : i32, i32, i32
  }
  func.func @transform_4(%arg0: i32) -> (i32, i32, i32) {
    %c0_i32 = arith.constant 0 : i32
    %c0_i32_0 = arith.constant 0 : i32
    %c0_i32_1 = arith.constant 0 : i32
    return %arg0, %c0_i32, %c0_i32_0 : i32, i32, i32
  }
}

module attributes {stable_mosaic.version = 11 : i64} {
  func.func @_self_attention_kernel(%arg0: i32, %arg1: memref<3x128x128xf32, #tpu.memory_space<vmem>>, %arg2: memref<2x8x128xf32, #tpu.memory_space<vmem>>, %arg3: memref<2x8x128xf32, #tpu.memory_space<vmem>>, %arg4: memref<2x8x128xf32, #tpu.memory_space<vmem>>, %arg5: memref<2x8x128xf32, #tpu.memory_space<vmem>>) attributes {dimension_semantics = [#tpu.dimension_semantics<parallel>], iteration_bounds = array<i64: 1>, scalar_prefetch = 0 : i64, scratch_operands = 0 : i64, tpu.core_type = #tpu.core_type<tc>, window_params = [{pipeline_mode = #tpu.pipeline_mode<synchronous>, transform_indices = @transform_0, window_bounds = array<i64: 3, 128, 128>}, {transform_indices = @transform_1, window_bounds = array<i64: 2, 8, 128>}, {transform_indices = @transform_2, window_bounds = array<i64: 2, 8, 128>}, {transform_indices = @transform_3, window_bounds = array<i64: 2, 8, 128>}, {transform_indices = @transform_4, window_bounds = array<i64: 2, 8, 128>}]} {
    %c0 = arith.constant 0 : index
    %c0_0 = arith.constant 0 : index
    %c0_1 = arith.constant 0 : index
    %0 = vector.load %arg1[%c0, %c0_0, %c0_1] : memref<3x128x128xf32, #tpu.memory_space<vmem>>, vector<1x128x128xf32>
    %1 = vector.shape_cast %0 : vector<1x128x128xf32> to vector<128x128xf32>
    %c1 = arith.constant 1 : index
    %c0_2 = arith.constant 0 : index
    %c0_3 = arith.constant 0 : index
    %2 = vector.load %arg1[%c1, %c0_2, %c0_3] : memref<3x128x128xf32, #tpu.memory_space<vmem>>, vector<1x128x128xf32>
    %3 = vector.shape_cast %2 : vector<1x128x128xf32> to vector<128x128xf32>
    %c2 = arith.constant 2 : index
    %c0_4 = arith.constant 0 : index
    %c0_5 = arith.constant 0 : index
    %4 = vector.load %arg1[%c2, %c0_4, %c0_5] : memref<3x128x128xf32, #tpu.memory_space<vmem>>, vector<1x128x128xf32>
    %5 = vector.shape_cast %4 : vector<1x128x128xf32> to vector<128x128xf32>
    %c0_6 = arith.constant 0 : index
    %c0_7 = arith.constant 0 : index
    %c0_8 = arith.constant 0 : index
    %6 = vector.load %arg2[%c0_6, %c0_7, %c0_8] : memref<2x8x128xf32, #tpu.memory_space<vmem>>, vector<2x8x128xf32>
    %7 = vector.shape_cast %6 : vector<2x8x128xf32> to vector<16x128xf32>
    %c0_9 = arith.constant 0 : index
    %c0_10 = arith.constant 0 : index
    %c0_11 = arith.constant 0 : index
    %8 = vector.load %arg3[%c0_9, %c0_10, %c0_11] : memref<2x8x128xf32, #tpu.memory_space<vmem>>, vector<2x8x128xf32>
    %9 = vector.shape_cast %8 : vector<2x8x128xf32> to vector<16x128xf32>
    %c0_12 = arith.constant 0 : index
    %c0_13 = arith.constant 0 : index
    %c0_14 = arith.constant 0 : index
    %10 = vector.load %arg4[%c0_12, %c0_13, %c0_14] : memref<2x8x128xf32, #tpu.memory_space<vmem>>, vector<2x8x128xf32>
    %11 = vector.shape_cast %10 : vector<2x8x128xf32> to vector<16x128xf32>
    %cst = arith.constant dense<0.000000e+00> : vector<16x128xf32>
    %12 = tpu.matmul %7, %1, %cst {dimension_numbers = #tpu.dot_dimension_numbers<[1], [0], [0], [1], [0, 0, 1, 1], [], []>} : vector<16x128xf32>, vector<128x128xf32>, vector<16x128xf32> -> vector<16x128xf32>
    %cst_15 = arith.constant dense<0.000000e+00> : vector<16x128xf32>
    %13 = tpu.matmul %9, %3, %cst_15 {dimension_numbers = #tpu.dot_dimension_numbers<[1], [0], [0], [1], [0, 0, 1, 1], [], []>} : vector<16x128xf32>, vector<128x128xf32>, vector<16x128xf32> -> vector<16x128xf32>
    %cst_16 = arith.constant dense<0.000000e+00> : vector<16x128xf32>
    %14 = tpu.matmul %11, %5, %cst_16 {dimension_numbers = #tpu.dot_dimension_numbers<[1], [0], [0], [1], [0, 0, 1, 1], [], []>} : vector<16x128xf32>, vector<128x128xf32>, vector<16x128xf32> -> vector<16x128xf32>
    %15 = vector.shape_cast %12 : vector<16x128xf32> to vector<2x8x128xf32>
    %16 = vector.shape_cast %13 : vector<16x128xf32> to vector<2x8x128xf32>
    %17 = vector.shape_cast %14 : vector<16x128xf32> to vector<2x8x128xf32>
    "tpu.trace_start"() <{level = 10 : i32, message = "bqe,bke->bqk"}> : () -> ()
    %cst_17 = arith.constant dense<0.000000e+00> : vector<2x8x8xf32>
    %18 = tpu.matmul %17, %16, %cst_17 {dimension_numbers = #tpu.dot_dimension_numbers<[2], [2], [1], [1], [0, 0, 0, 1, 1, 1], [0], [0]>} : vector<2x8x128xf32>, vector<2x8x128xf32>, vector<2x8x8xf32> -> vector<2x8x8xf32>
    "tpu.trace_stop"() : () -> ()
    %cst_18 = arith.constant dense<0xFF800000> : vector<2x8xf32>
    %19 = vector.multi_reduction <maximumf>, %18, %cst_18 [2] : vector<2x8x8xf32> to vector<2x8xf32>
    %20 = vector.shape_cast %19 : vector<2x8xf32> to vector<2x8x1xf32>
    %21 = vector.broadcast %20 : vector<2x8x1xf32> to vector<2x8x8xf32>
    %22 = arith.subf %18, %21 : vector<2x8x8xf32>
    %23 = math.exp %22 : vector<2x8x8xf32>
    %cst_19 = arith.constant dense<0.000000e+00> : vector<2x8xf32>
    %24 = vector.multi_reduction <add>, %23, %cst_19 [2] : vector<2x8x8xf32> to vector<2x8xf32>
    %25 = vector.shape_cast %24 : vector<2x8xf32> to vector<2x8x1xf32>
    %cst_20 = arith.constant 5.65685415 : f32
    %26 = vector.broadcast %cst_20 : f32 to vector<2x8x1xf32>
    %27 = arith.mulf %25, %26 : vector<2x8x1xf32>
    %28 = tpu.reciprocal %27 : vector<2x8x1xf32> -> vector<2x8x1xf32>
    %29 = vector.broadcast %28 : vector<2x8x1xf32> to vector<2x8x8xf32>
    %30 = arith.mulf %23, %29 : vector<2x8x8xf32>
    "tpu.trace_start"() <{level = 10 : i32, message = "bqk,bke->bqe"}> : () -> ()
    %cst_21 = arith.constant dense<0.000000e+00> : vector<2x8x128xf32>
    %31 = tpu.matmul %30, %15, %cst_21 {dimension_numbers = #tpu.dot_dimension_numbers<[2], [1], [1], [2], [0, 0, 0, 1, 1, 2], [0], [0]>} : vector<2x8x8xf32>, vector<2x8x128xf32>, vector<2x8x128xf32> -> vector<2x8x128xf32>
    "tpu.trace_stop"() : () -> ()
    %c0_22 = arith.constant 0 : index
    %c0_23 = arith.constant 0 : index
    %c0_24 = arith.constant 0 : index
    %32 = vector.load %arg5[%c0_22, %c0_23, %c0_24] : memref<2x8x128xf32, #tpu.memory_space<vmem>>, vector<2x8x128xf32>
    tpu.vector_store %arg5[%c0_22, %c0_23, %c0_24], %31 {strides = array<i32>} : memref<2x8x128xf32, #tpu.memory_space<vmem>>, vector<2x8x128xf32>,
    return
  }
  func.func @transform_0(%arg0: i32) -> (i32, i32, i32) {
    %c0_i32 = arith.constant 0 : i32
    %c0_i32_0 = arith.constant 0 : i32
    %c0_i32_1 = arith.constant 0 : i32
    %c0_i32_2 = arith.constant 0 : i32
    return %c0_i32, %c0_i32_0, %c0_i32_1 : i32, i32, i32
  }
  func.func @transform_1(%arg0: i32) -> (i32, i32, i32) {
    %c0_i32 = arith.constant 0 : i32
    %c0_i32_0 = arith.constant 0 : i32
    %c0_i32_1 = arith.constant 0 : i32
    return %arg0, %c0_i32, %c0_i32_0 : i32, i32, i32
  }
  func.func @transform_2(%arg0: i32) -> (i32, i32, i32) {
    %c0_i32 = arith.constant 0 : i32
    %c0_i32_0 = arith.constant 0 : i32
    %c0_i32_1 = arith.constant 0 : i32
    return %arg0, %c0_i32, %c0_i32_0 : i32, i32, i32
  }
  func.func @transform_3(%arg0: i32) -> (i32, i32, i32) {
    %c0_i32 = arith.constant 0 : i32
    %c0_i32_0 = arith.constant 0 : i32
    %c0_i32_1 = arith.constant 0 : i32
    return %arg0, %c0_i32, %c0_i32_0 : i32, i32, i32
  }
  func.func @transform_4(%arg0: i32) -> (i32, i32, i32) {
    %c0_i32 = arith.constant 0 : i32
    %c0_i32_0 = arith.constant 0 : i32
    %c0_i32_1 = arith.constant 0 : i32
    return %arg0, %c0_i32, %c0_i32_0 : i32, i32, i32
  }
}

</mosaic_0001>

<llo_original>
// kernel: tpu_custom_call.1
$region0: #{tpu_custom_call.1}
  #allocation0 [shape = 'u32[]', space=smem, size = 0x4, offset = 0x4, fixed_abs, tag = 'smem constant byte address 0x4 - core index']
  #allocation1 [shape = 'u32[144,128]{1,0:T(1,128)}', space=vmem, size = 0x12000, scoped, tag = 'internal scratch']
  %s0 = inlined_call_operand.hbm [shape: f32[3,128,128], index: 0, kind: input, shape index: {}]
  %s1 = inlined_call_operand.hbm [shape: f32[2,8,128], index: 1, kind: input, shape index: {}]
  %s2 = inlined_call_operand.hbm [shape: f32[2,8,128], index: 2, kind: input, shape index: {}]
  %s3 = inlined_call_operand.hbm [shape: f32[2,8,128], index: 3, kind: input, shape index: {}]
  %s4 = inlined_call_operand.hbm [shape: f32[2,8,128], index: 4, kind: output, shape index: {}]
  %s5 = sld [smem:[#allocation0]]
  $region42: #{tpu_custom_call.1} parent=0
    _
  %s7 = ssub.s32 1, %s5
  %s8 = scalar_select 0, %s7, %s5
  $region1: #{tpu_custom_call.1} parent=0
    #allocation2 [shape = 'u8[196608]{0}', space=vmem, size = 0x30000, scoped, tag = 'input window, operand 0, single buffered']
    #allocation3 [shape = 's32[1]{0}', space=sflag, size = 0x4, scoped, tag = 'scoped memory for tpu_custom_call.1']
    #allocation4 [shape = 's32[1]{0}', space=sflag, size = 0x4, scoped, tag = 'scoped memory for tpu_custom_call.1']
    #allocation5 [shape = 'u8[8192]{0}', space=vmem, size = 0x2000, scoped, tag = 'input window, operand 1, single buffered']
    #allocation6 [shape = 's32[1]{0}', space=sflag, size = 0x4, scoped, tag = 'scoped memory for tpu_custom_call.1']
    #allocation7 [shape = 'u8[8192]{0}', space=vmem, size = 0x2000, scoped, tag = 'input window, operand 2, single buffered']
    #allocation8 [shape = 'u8[8192]{0}', space=vmem, size = 0x2000, scoped, tag = 'input window, operand 3, single buffered']
    #allocation9 [shape = 's32[1]{0}', space=sflag, size = 0x4, scoped, tag = 'scoped memory for tpu_custom_call.1']
    #allocation10 [shape = 'u8[8192]{0}', space=vmem, size = 0x2000, scoped, tag = 'output window, operand 0, single buffered']
    %9 = vsyncpa [#allocation3], 0
    %10 = vsyncpa [#allocation6], 0
    %11 = vsyncpa [#allocation9], 0
    %12 = vsyncpa [#allocation4], 0
    // Predicated region
    $region2: #{tpu_custom_call.1} parent=1 // pred_check
      _
    $region3: #{tpu_custom_call.1} parent=1 // pred_check_branch
      %14 = sbr.rel (0) target = $region5
    $region4: #{tpu_custom_call.1} parent=1 // pred_region
      %s16 = ssub.s32 6144, 6144
      %17 = vsyncadd [#allocation3], %s16
      %s18 = sshll.u32 [#allocation2], 4
      %s19 = int_to_ptr.vmem [resolvable:$true] %s18
      %24 = dma.hbm_to_vmem [thread:$0]  %s0, 6144, %s19, [#allocation3], 128, 128, 8
    $region5: #{tpu_custom_call.1} parent=1 // pred_fallthru
      _
    // Predicated region
    $region6: #{tpu_custom_call.1} parent=1 // pred_check
      _
    $region7: #{tpu_custom_call.1} parent=1 // pred_check_branch
      %26 = sbr.rel (0) target = $region9
    $region8: #{tpu_custom_call.1} parent=1 // pred_region
      %s28 = ssub.s32 256, 256
      %29 = vsyncadd [#allocation6], %s28
      %s30 = sshll.u32 [#allocation5], 4
      %s31 = int_to_ptr.vmem [resolvable:$true] %s30
      %36 = dma.hbm_to_vmem [thread:$0]  %s1, 256, %s31, [#allocation6], 128, 128, 8
    $region9: #{tpu_custom_call.1} parent=1 // pred_fallthru
      _
    // Predicated region
    $region10: #{tpu_custom_call.1} parent=1 // pred_check
      _
    $region11: #{tpu_custom_call.1} parent=1 // pred_check_branch
      %38 = sbr.rel (0) target = $region13
    $region12: #{tpu_custom_call.1} parent=1 // pred_region
      %s40 = ssub.s32 256, 256
      %41 = vsyncadd [#allocation6], %s40
      %s42 = sshll.u32 [#allocation7], 4
      %s43 = int_to_ptr.vmem [resolvable:$true] %s42
      %48 = dma.hbm_to_vmem [thread:$0]  %s2, 256, %s43, [#allocation6], 128, 128, 8
    $region13: #{tpu_custom_call.1} parent=1 // pred_fallthru
      _
    // Predicated region
    $region14: #{tpu_custom_call.1} parent=1 // pred_check
      _
    $region15: #{tpu_custom_call.1} parent=1 // pred_check_branch
      %50 = sbr.rel (0) target = $region17
    $region16: #{tpu_custom_call.1} parent=1 // pred_region
      %s52 = ssub.s32 256, 256
      %53 = vsyncadd [#allocation9], %s52
      %s54 = sshll.u32 [#allocation8], 4
      %s55 = int_to_ptr.vmem [resolvable:$true] %s54
      %60 = dma.hbm_to_vmem [thread:$0]  %s3, 256, %s55, [#allocation9], 128, 128, 8
    $region17: #{tpu_custom_call.1} parent=1 // pred_fallthru
      _
    // Predicated region
    $region18: #{tpu_custom_call.1} parent=1 // pred_check
      _
    $region19: #{tpu_custom_call.1} parent=1 // pred_check_branch
      %62 = sbr.rel (0) target = $region21
    $region20: #{tpu_custom_call.1} parent=1 // pred_region
      %63 = dma.done [#allocation3], 6144
    $region21: #{tpu_custom_call.1} parent=1 // pred_fallthru
      _
    // Predicated region
    $region22: #{tpu_custom_call.1} parent=1 // pred_check
      _
    $region23: #{tpu_custom_call.1} parent=1 // pred_check_branch
      %65 = sbr.rel (0) target = $region25
    $region24: #{tpu_custom_call.1} parent=1 // pred_region
      %66 = dma.done [#allocation6], 256
    $region25: #{tpu_custom_call.1} parent=1 // pred_fallthru
      _
    // Predicated region
    $region26: #{tpu_custom_call.1} parent=1 // pred_check
      _
    $region27: #{tpu_custom_call.1} parent=1 // pred_check_branch
      %68 = sbr.rel (0) target = $region29
    $region28: #{tpu_custom_call.1} parent=1 // pred_region
      %69 = dma.done [#allocation6], 256
    $region29: #{tpu_custom_call.1} parent=1 // pred_fallthru
      _
    // Predicated region
    $region30: #{tpu_custom_call.1} parent=1 // pred_check
      _
    $region31: #{tpu_custom_call.1} parent=1 // pred_check_branch
      %71 = sbr.rel (0) target = $region33
    $region32: #{tpu_custom_call.1} parent=1 // pred_region
      %72 = dma.done [#allocation9], 256
    $region33: #{tpu_custom_call.1} parent=1 // pred_fallthru
      _
    %v73 = vld [vmem:[#allocation2] sm:$0xff]
    %v74 = vld [vmem:[#allocation2 + $0x8] sm:$0xff]
    %v75 = vld [vmem:[#allocation2 + $0x10] sm:$0xff]
    %v76 = vld [vmem:[#allocation2 + $0x18] sm:$0xff]
    %v77 = vld [vmem:[#allocation2 + $0x20] sm:$0xff]
    %v78 = vld [vmem:[#allocation2 + $0x28] sm:$0xff]
    %v79 = vld [vmem:[#allocation2 + $0x30] sm:$0xff]
    %v80 = vld [vmem:[#allocation2 + $0x38] sm:$0xff]
    %v81 = vld [vmem:[#allocation2 + $0x40] sm:$0xff]
    %v82 = vld [vmem:[#allocation2 + $0x48] sm:$0xff]
    %v83 = vld [vmem:[#allocation2 + $0x50] sm:$0xff]
    %v84 = vld [vmem:[#allocation2 + $0x58] sm:$0xff]
    %v85 = vld [vmem:[#allocation2 + $0x60] sm:$0xff]
    %v86 = vld [vmem:[#allocation2 + $0x68] sm:$0xff]
    %v87 = vld [vmem:[#allocation2 + $0x70] sm:$0xff]
    %v88 = vld [vmem:[#allocation2 + $0x78] sm:$0xff]
    %s89 = scalar_lea.vmem [#allocation2], 128
    %v90 = vld [vmem:[%s89] sm:$0xff]
    %v91 = vld [vmem:[%s89 + $0x8] sm:$0xff]
    %v92 = vld [vmem:[%s89 + $0x10] sm:$0xff]
    %v93 = vld [vmem:[%s89 + $0x18] sm:$0xff]
    %v94 = vld [vmem:[%s89 + $0x20] sm:$0xff]
    %v95 = vld [vmem:[%s89 + $0x28] sm:$0xff]
    %v96 = vld [vmem:[%s89 + $0x30] sm:$0xff]
    %v97 = vld [vmem:[%s89 + $0x38] sm:$0xff]
    %v98 = vld [vmem:[%s89 + $0x40] sm:$0xff]
    %v99 = vld [vmem:[%s89 + $0x48] sm:$0xff]
    %v100 = vld [vmem:[%s89 + $0x50] sm:$0xff]
    %v101 = vld [vmem:[%s89 + $0x58] sm:$0xff]
    %v102 = vld [vmem:[%s89 + $0x60] sm:$0xff]
    %v103 = vld [vmem:[%s89 + $0x68] sm:$0xff]
    %v104 = vld [vmem:[%s89 + $0x70] sm:$0xff]
    %v105 = vld [vmem:[%s89 + $0x78] sm:$0xff]
    %s106 = scalar_lea.vmem [#allocation2], 256
    %v107 = vld [vmem:[%s106] sm:$0xff]
    %v108 = vld [vmem:[%s106 + $0x8] sm:$0xff]
    %v109 = vld [vmem:[%s106 + $0x10] sm:$0xff]
    %v110 = vld [vmem:[%s106 + $0x18] sm:$0xff]
    %v111 = vld [vmem:[%s106 + $0x20] sm:$0xff]
    %v112 = vld [vmem:[%s106 + $0x28] sm:$0xff]
    %v113 = vld [vmem:[%s106 + $0x30] sm:$0xff]
    %v114 = vld [vmem:[%s106 + $0x38] sm:$0xff]
    %v115 = vld [vmem:[%s106 + $0x40] sm:$0xff]
    %v116 = vld [vmem:[%s106 + $0x48] sm:$0xff]
    %v117 = vld [vmem:[%s106 + $0x50] sm:$0xff]
    %v118 = vld [vmem:[%s106 + $0x58] sm:$0xff]
    %v119 = vld [vmem:[%s106 + $0x60] sm:$0xff]
    %v120 = vld [vmem:[%s106 + $0x68] sm:$0xff]
    %v121 = vld [vmem:[%s106 + $0x70] sm:$0xff]
    %v122 = vld [vmem:[%s106 + $0x78] sm:$0xff]
    %v123 = vld [vmem:[#allocation5] sm:$0xff]
    %v124 = vld [vmem:[#allocation5 + $0x8] sm:$0xff]
    %v125 = vld [vmem:[#allocation7] sm:$0xff]
    %v126 = vld [vmem:[#allocation7 + $0x8] sm:$0xff]
    %v127 = vld [vmem:[#allocation8] sm:$0xff]
    %v128 = vld [vmem:[#allocation8 + $0x8] sm:$0xff]
    %129 = vmatprep.subr.mxu0 0.0
    %130 = vmatpush1.msra.mxu0 %v88
    %131 = vmatprep.subr.mxu0 0.0
    %132 = vmatpush1.msra.mxu0 %v87
    %133 = vmatprep.subr.mxu0 0.0
    %134 = vmatpush1.msra.mxu0 %v86
    %135 = vmatprep.subr.mxu0 0.0
    %136 = vmatpush1.msra.mxu0 %v85
    %137 = vmatprep.subr.mxu0 0.0
    %138 = vmatpush1.msra.mxu0 %v84
    %139 = vmatprep.subr.mxu0 0.0
    %140 = vmatpush1.msra.mxu0 %v83
    %141 = vmatprep.subr.mxu0 0.0
    %142 = vmatpush1.msra.mxu0 %v82
    %143 = vmatprep.subr.mxu0 0.0
    %144 = vmatpush1.msra.mxu0 %v81
    %145 = vmatprep.subr.mxu0 0.0
    %146 = vmatpush1.msra.mxu0 %v80
    %147 = vmatprep.subr.mxu0 0.0
    %148 = vmatpush1.msra.mxu0 %v79
    %149 = vmatprep.subr.mxu0 0.0
    %150 = vmatpush1.msra.mxu0 %v78
    %151 = vmatprep.subr.mxu0 0.0
    %152 = vmatpush1.msra.mxu0 %v77
    %153 = vmatprep.subr.mxu0 0.0
    %154 = vmatpush1.msra.mxu0 %v76
    %155 = vmatprep.subr.mxu0 0.0
    %156 = vmatpush1.msra.mxu0 %v75
    %157 = vmatprep.subr.mxu0 0.0
    %158 = vmatpush1.msra.mxu0 %v74
    %159 = vmatprep.subr.mxu0 0.0
    %160 = vmatpush1.msra.mxu0 %v73
    %161 = vmatprep.subr.mxu0 0.0
    %162 = vmatpush2.msra.mxu0 0.0
    %163 = vmatprep.subr.mxu0 0.0
    %164 = vmatpush2.msra.mxu0 0.0
    %165 = vmatprep.subr.mxu0 0.0
    %166 = vmatpush2.msra.mxu0 0.0
    %167 = vmatprep.subr.mxu0 0.0
    %168 = vmatpush2.msra.mxu0 0.0
    %169 = vmatprep.subr.mxu0 0.0
    %170 = vmatpush2.msra.mxu0 0.0
    %171 = vmatprep.subr.mxu0 0.0
    %172 = vmatpush2.msra.mxu0 0.0
    %173 = vmatprep.subr.mxu0 0.0
    %174 = vmatpush2.msra.mxu0 0.0
    %175 = vmatprep.subr.mxu0 0.0
    %176 = vmatpush2.msra.mxu0 0.0
    %177 = vmatprep.subr.mxu0 0.0
    %178 = vmatpush2.msra.mxu0 0.0
    %179 = vmatprep.subr.mxu0 0.0
    %180 = vmatpush2.msra.mxu0 0.0
    %181 = vmatprep.subr.mxu0 0.0
    %182 = vmatpush2.msra.mxu0 0.0
    %183 = vmatprep.subr.mxu0 0.0
    %184 = vmatpush2.msra.mxu0 0.0
    %185 = vmatprep.subr.mxu0 0.0
    %186 = vmatpush2.msra.mxu0 0.0
    %187 = vmatprep.subr.mxu0 0.0
    %188 = vmatpush2.msra.mxu0 0.0
    %189 = vmatprep.subr.mxu0 0.0
    %190 = vmatpush2.msra.mxu0 0.0
    %191 = vmatprep.subr.mxu0 0.0
    %192 = vmatpush2.msra.mxu0 0.0
    %193 = vmatprep.mubr.f32.mxu0 0.0
    %194 = vmatmul.mubr.f32.gmra.mxu0 %v123
    %v195 = vpop.f32.mrf.mxu0
    %v196 = vadd.f32 0.0, %v195
    %v197 = vpop.f32.mrf.mxu0
    %198 = vmatprep.mubr.f32.mxu0 0.0
    %199 = vmatmul.mubr.f32.gmra.mxu0 %v124
    %v200 = vpop.f32.mrf.mxu0
    %v201 = vadd.f32 0.0, %v200
    %v202 = vpop.f32.mrf.mxu0
    %203 = vdwg.mxu0
    %204 = vmatprep.subr.mxu0 0.0
    %205 = vmatpush1.msra.mxu0 %v105
    %206 = vmatprep.subr.mxu0 0.0
    %207 = vmatpush1.msra.mxu0 %v104
    %208 = vmatprep.subr.mxu0 0.0
    %209 = vmatpush1.msra.mxu0 %v103
    %210 = vmatprep.subr.mxu0 0.0
    %211 = vmatpush1.msra.mxu0 %v102
    %212 = vmatprep.subr.mxu0 0.0
    %213 = vmatpush1.msra.mxu0 %v101
    %214 = vmatprep.subr.mxu0 0.0
    %215 = vmatpush1.msra.mxu0 %v100
    %216 = vmatprep.subr.mxu0 0.0
    %217 = vmatpush1.msra.mxu0 %v99
    %218 = vmatprep.subr.mxu0 0.0
    %219 = vmatpush1.msra.mxu0 %v98
    %220 = vmatprep.subr.mxu0 0.0
    %221 = vmatpush1.msra.mxu0 %v97
    %222 = vmatprep.subr.mxu0 0.0
    %223 = vmatpush1.msra.mxu0 %v96
    %224 = vmatprep.subr.mxu0 0.0
    %225 = vmatpush1.msra.mxu0 %v95
    %226 = vmatprep.subr.mxu0 0.0
    %227 = vmatpush1.msra.mxu0 %v94
    %228 = vmatprep.subr.mxu0 0.0
    %229 = vmatpush1.msra.mxu0 %v93
    %230 = vmatprep.subr.mxu0 0.0
    %231 = vmatpush1.msra.mxu0 %v92
    %232 = vmatprep.subr.mxu0 0.0
    %233 = vmatpush1.msra.mxu0 %v91
    %234 = vmatprep.subr.mxu0 0.0
    %235 = vmatpush1.msra.mxu0 %v90
    %236 = vmatprep.subr.mxu0 0.0
    %237 = vmatpush2.msra.mxu0 0.0
    %238 = vmatprep.subr.mxu0 0.0
    %239 = vmatpush2.msra.mxu0 0.0
    %240 = vmatprep.subr.mxu0 0.0
    %241 = vmatpush2.msra.mxu0 0.0
    %242 = vmatprep.subr.mxu0 0.0
    %243 = vmatpush2.msra.mxu0 0.0
    %244 = vmatprep.subr.mxu0 0.0
    %245 = vmatpush2.msra.mxu0 0.0
    %246 = vmatprep.subr.mxu0 0.0
    %247 = vmatpush2.msra.mxu0 0.0
    %248 = vmatprep.subr.mxu0 0.0
    %249 = vmatpush2.msra.mxu0 0.0
    %250 = vmatprep.subr.mxu0 0.0
    %251 = vmatpush2.msra.mxu0 0.0
    %252 = vmatprep.subr.mxu0 0.0
    %253 = vmatpush2.msra.mxu0 0.0
    %254 = vmatprep.subr.mxu0 0.0
    %255 = vmatpush2.msra.mxu0 0.0
    %256 = vmatprep.subr.mxu0 0.0
    %257 = vmatpush2.msra.mxu0 0.0
    %258 = vmatprep.subr.mxu0 0.0
    %259 = vmatpush2.msra.mxu0 0.0
    %260 = vmatprep.subr.mxu0 0.0
    %261 = vmatpush2.msra.mxu0 0.0
    %262 = vmatprep.subr.mxu0 0.0
    %263 = vmatpush2.msra.mxu0 0.0
    %264 = vmatprep.subr.mxu0 0.0
    %265 = vmatpush2.msra.mxu0 0.0
    %266 = vmatprep.subr.mxu0 0.0
    %267 = vmatpush2.msra.mxu0 0.0
    %268 = vmatprep.mubr.f32.mxu0 0.0
    %269 = vmatmul.mubr.f32.gmra.mxu0 %v125
    %v270 = vpop.f32.mrf.mxu0
    %v271 = vadd.f32 0.0, %v270
    %v272 = vpop.f32.mrf.mxu0
    %273 = vmatprep.mubr.f32.mxu0 0.0
    %274 = vmatmul.mubr.f32.gmra.mxu0 %v126
    %v275 = vpop.f32.mrf.mxu0
    %v276 = vadd.f32 0.0, %v275
    %v277 = vpop.f32.mrf.mxu0
    %278 = vdwg.mxu0
    %279 = vmatprep.subr.mxu0 0.0
    %280 = vmatpush1.msra.mxu0 %v122
    %281 = vmatprep.subr.mxu0 0.0
    %282 = vmatpush1.msra.mxu0 %v121
    %283 = vmatprep.subr.mxu0 0.0
    %284 = vmatpush1.msra.mxu0 %v120
    %285 = vmatprep.subr.mxu0 0.0
    %286 = vmatpush1.msra.mxu0 %v119
    %287 = vmatprep.subr.mxu0 0.0
    %288 = vmatpush1.msra.mxu0 %v118
    %289 = vmatprep.subr.mxu0 0.0
    %290 = vmatpush1.msra.mxu0 %v117
    %291 = vmatprep.subr.mxu0 0.0
    %292 = vmatpush1.msra.mxu0 %v116
    %293 = vmatprep.subr.mxu0 0.0
    %294 = vmatpush1.msra.mxu0 %v115
    %295 = vmatprep.subr.mxu0 0.0
    %296 = vmatpush1.msra.mxu0 %v114
    %297 = vmatprep.subr.mxu0 0.0
    %298 = vmatpush1.msra.mxu0 %v113
    %299 = vmatprep.subr.mxu0 0.0
    %300 = vmatpush1.msra.mxu0 %v112
    %301 = vmatprep.subr.mxu0 0.0
    %302 = vmatpush1.msra.mxu0 %v111
    %303 = vmatprep.subr.mxu0 0.0
    %304 = vmatpush1.msra.mxu0 %v110
    %305 = vmatprep.subr.mxu0 0.0
    %306 = vmatpush1.msra.mxu0 %v109
    %307 = vmatprep.subr.mxu0 0.0
    %308 = vmatpush1.msra.mxu0 %v108
    %309 = vmatprep.subr.mxu0 0.0
    %310 = vmatpush1.msra.mxu0 %v107
    %311 = vmatprep.subr.mxu0 0.0
    %312 = vmatpush2.msra.mxu0 0.0
    %313 = vmatprep.subr.mxu0 0.0
    %314 = vmatpush2.msra.mxu0 0.0
    %315 = vmatprep.subr.mxu0 0.0
    %316 = vmatpush2.msra.mxu0 0.0
    %317 = vmatprep.subr.mxu0 0.0
    %318 = vmatpush2.msra.mxu0 0.0
    %319 = vmatprep.subr.mxu0 0.0
    %320 = vmatpush2.msra.mxu0 0.0
    %321 = vmatprep.subr.mxu0 0.0
    %322 = vmatpush2.msra.mxu0 0.0
    %323 = vmatprep.subr.mxu0 0.0
    %324 = vmatpush2.msra.mxu0 0.0
    %325 = vmatprep.subr.mxu0 0.0
    %326 = vmatpush2.msra.mxu0 0.0
    %327 = vmatprep.subr.mxu0 0.0
    %328 = vmatpush2.msra.mxu0 0.0
    %329 = vmatprep.subr.mxu0 0.0
    %330 = vmatpush2.msra.mxu0 0.0
    %331 = vmatprep.subr.mxu0 0.0
    %332 = vmatpush2.msra.mxu0 0.0
    %333 = vmatprep.subr.mxu0 0.0
    %334 = vmatpush2.msra.mxu0 0.0
    %335 = vmatprep.subr.mxu0 0.0
    %336 = vmatpush2.msra.mxu0 0.0
    %337 = vmatprep.subr.mxu0 0.0
    %338 = vmatpush2.msra.mxu0 0.0
    %339 = vmatprep.subr.mxu0 0.0
    %340 = vmatpush2.msra.mxu0 0.0
    %341 = vmatprep.subr.mxu0 0.0
    %342 = vmatpush2.msra.mxu0 0.0
    %343 = vmatprep.mubr.f32.mxu0 0.0
    %344 = vmatmul.mubr.f32.gmra.mxu0 %v127
    %v345 = vpop.f32.mrf.mxu0
    %v346 = vadd.f32 0.0, %v345
    %v347 = vpop.f32.mrf.mxu0
    %348 = vmatprep.mubr.f32.mxu0 0.0
    %349 = vmatmul.mubr.f32.gmra.mxu0 %v128
    %v350 = vpop.f32.mrf.mxu0
    %v351 = vadd.f32 0.0, %v350
    %v352 = vpop.f32.mrf.mxu0
    %353 = vdwg.mxu0
    %354 = vmatprep.subr.mxu0 0.0
    %355 = vmatpush1.xpose.msra.mxu0 0.0
    %356 = vmatprep.subr.mxu0 0.0
    %357 = vmatpush1.xpose.msra.mxu0 0.0
    %358 = vmatprep.subr.mxu0 0.0
    %359 = vmatpush1.xpose.msra.mxu0 0.0
    %360 = vmatprep.subr.mxu0 0.0
    %361 = vmatpush1.xpose.msra.mxu0 0.0
    %362 = vmatprep.subr.mxu0 0.0
    %363 = vmatpush1.xpose.msra.mxu0 0.0
    %364 = vmatprep.subr.mxu0 0.0
    %365 = vmatpush1.xpose.msra.mxu0 0.0
    %366 = vmatprep.subr.mxu0 0.0
    %367 = vmatpush1.xpose.msra.mxu0 0.0
    %368 = vmatprep.subr.mxu0 0.0
    %369 = vmatpush1.xpose.msra.mxu0 0.0
    %370 = vmatprep.subr.mxu0 0.0
    %371 = vmatpush1.xpose.msra.mxu0 0.0
    %372 = vmatprep.subr.mxu0 0.0
    %373 = vmatpush1.xpose.msra.mxu0 0.0
    %374 = vmatprep.subr.mxu0 0.0
    %375 = vmatpush1.xpose.msra.mxu0 0.0
    %376 = vmatprep.subr.mxu0 0.0
    %377 = vmatpush1.xpose.msra.mxu0 0.0
    %378 = vmatprep.subr.mxu0 0.0
    %379 = vmatpush1.xpose.msra.mxu0 0.0
    %380 = vmatprep.subr.mxu0 0.0
    %381 = vmatpush1.xpose.msra.mxu0 0.0
    %382 = vmatprep.subr.mxu0 0.0
    %383 = vmatpush1.xpose.msra.mxu0 0.0
    %384 = vmatprep.subr.mxu0 0.0
    %385 = vmatpush1.xpose.msra.mxu0 %v271
    %386 = vmatprep.subr.mxu0 0.0
    %387 = vmatpush2.xpose.msra.mxu0 0.0
    %388 = vmatprep.subr.mxu0 0.0
    %389 = vmatpush2.xpose.msra.mxu0 0.0
    %390 = vmatprep.subr.mxu0 0.0
    %391 = vmatpush2.xpose.msra.mxu0 0.0
    %392 = vmatprep.subr.mxu0 0.0
    %393 = vmatpush2.xpose.msra.mxu0 0.0
    %394 = vmatprep.subr.mxu0 0.0
    %395 = vmatpush2.xpose.msra.mxu0 0.0
    %396 = vmatprep.subr.mxu0 0.0
    %397 = vmatpush2.xpose.msra.mxu0 0.0
    %398 = vmatprep.subr.mxu0 0.0
    %399 = vmatpush2.xpose.msra.mxu0 0.0
    %400 = vmatprep.subr.mxu0 0.0
    %401 = vmatpush2.xpose.msra.mxu0 0.0
    %402 = vmatprep.subr.mxu0 0.0
    %403 = vmatpush2.xpose.msra.mxu0 0.0
    %404 = vmatprep.subr.mxu0 0.0
    %405 = vmatpush2.xpose.msra.mxu0 0.0
    %406 = vmatprep.subr.mxu0 0.0
    %407 = vmatpush2.xpose.msra.mxu0 0.0
    %408 = vmatprep.subr.mxu0 0.0
    %409 = vmatpush2.xpose.msra.mxu0 0.0
    %410 = vmatprep.subr.mxu0 0.0
    %411 = vmatpush2.xpose.msra.mxu0 0.0
    %412 = vmatprep.subr.mxu0 0.0
    %413 = vmatpush2.xpose.msra.mxu0 0.0
    %414 = vmatprep.subr.mxu0 0.0
    %415 = vmatpush2.xpose.msra.mxu0 0.0
    %416 = vmatprep.subr.mxu0 0.0
    %417 = vmatpush2.xpose.msra.mxu0 0.0
    %418 = vmatprep.mubr.f32.mxu0 0.0
    %419 = vmatmul.mubr.f32.gmra.mxu0 %v346
    %v420 = vpop.f32.mrf.mxu0
    %v421 = vadd.f32 0.0, %v420
    %v422 = vpop.f32.mrf.mxu0
    %423 = vdwg.mxu0
    %424 = vmatprep.subr.mxu0 0.0
    %425 = vmatpush1.xpose.msra.mxu0 0.0
    %426 = vmatprep.subr.mxu0 0.0
    %427 = vmatpush1.xpose.msra.mxu0 0.0
    %428 = vmatprep.subr.mxu0 0.0
    %429 = vmatpush1.xpose.msra.mxu0 0.0
    %430 = vmatprep.subr.mxu0 0.0
    %431 = vmatpush1.xpose.msra.mxu0 0.0
    %432 = vmatprep.subr.mxu0 0.0
    %433 = vmatpush1.xpose.msra.mxu0 0.0
    %434 = vmatprep.subr.mxu0 0.0
    %435 = vmatpush1.xpose.msra.mxu0 0.0
    %436 = vmatprep.subr.mxu0 0.0
    %437 = vmatpush1.xpose.msra.mxu0 0.0
    %438 = vmatprep.subr.mxu0 0.0
    %439 = vmatpush1.xpose.msra.mxu0 0.0
    %440 = vmatprep.subr.mxu0 0.0
    %441 = vmatpush1.xpose.msra.mxu0 0.0
    %442 = vmatprep.subr.mxu0 0.0
    %443 = vmatpush1.xpose.msra.mxu0 0.0
    %444 = vmatprep.subr.mxu0 0.0
    %445 = vmatpush1.xpose.msra.mxu0 0.0
    %446 = vmatprep.subr.mxu0 0.0
    %447 = vmatpush1.xpose.msra.mxu0 0.0
    %448 = vmatprep.subr.mxu0 0.0
    %449 = vmatpush1.xpose.msra.mxu0 0.0
    %450 = vmatprep.subr.mxu0 0.0
    %451 = vmatpush1.xpose.msra.mxu0 0.0
    %452 = vmatprep.subr.mxu0 0.0
    %453 = vmatpush1.xpose.msra.mxu0 0.0
    %454 = vmatprep.subr.mxu0 0.0
    %455 = vmatpush1.xpose.msra.mxu0 %v276
    %456 = vmatprep.subr.mxu0 0.0
    %457 = vmatpush2.xpose.msra.mxu0 0.0
    %458 = vmatprep.subr.mxu0 0.0
    %459 = vmatpush2.xpose.msra.mxu0 0.0
    %460 = vmatprep.subr.mxu0 0.0
    %461 = vmatpush2.xpose.msra.mxu0 0.0
    %462 = vmatprep.subr.mxu0 0.0
    %463 = vmatpush2.xpose.msra.mxu0 0.0
    %464 = vmatprep.subr.mxu0 0.0
    %465 = vmatpush2.xpose.msra.mxu0 0.0
    %466 = vmatprep.subr.mxu0 0.0
    %467 = vmatpush2.xpose.msra.mxu0 0.0
    %468 = vmatprep.subr.mxu0 0.0
    %469 = vmatpush2.xpose.msra.mxu0 0.0
    %470 = vmatprep.subr.mxu0 0.0
    %471 = vmatpush2.xpose.msra.mxu0 0.0
    %472 = vmatprep.subr.mxu0 0.0
    %473 = vmatpush2.xpose.msra.mxu0 0.0
    %474 = vmatprep.subr.mxu0 0.0
    %475 = vmatpush2.xpose.msra.mxu0 0.0
    %476 = vmatprep.subr.mxu0 0.0
    %477 = vmatpush2.xpose.msra.mxu0 0.0
    %478 = vmatprep.subr.mxu0 0.0
    %479 = vmatpush2.xpose.msra.mxu0 0.0
    %480 = vmatprep.subr.mxu0 0.0
    %481 = vmatpush2.xpose.msra.mxu0 0.0
    %482 = vmatprep.subr.mxu0 0.0
    %483 = vmatpush2.xpose.msra.mxu0 0.0
    %484 = vmatprep.subr.mxu0 0.0
    %485 = vmatpush2.xpose.msra.mxu0 0.0
    %486 = vmatprep.subr.mxu0 0.0
    %487 = vmatpush2.xpose.msra.mxu0 0.0
    %488 = vmatprep.mubr.f32.mxu0 0.0
    %489 = vmatmul.mubr.f32.gmra.mxu0 %v351
    %v490 = vpop.f32.mrf.mxu0
    %v491 = vadd.f32 0.0, %v490
    %v492 = vpop.f32.mrf.mxu0
    %493 = vdwg.mxu0
    %vm494 = vcmask 64512
    %v495 = vsel %vm494, %v421, -inf
    %496 = vmax.xlane.f32.xlu0 %v495
    %v497 = vpop.xlane.xlu0 %496
    %v498 = vsel %vm494, %v491, -inf
    %499 = vmax.xlane.f32.xlu0 %v498
    %v500 = vpop.xlane.xlu0 %499
    %v501 = vsub.f32 %v421, %v497
    %v502 = vsub.f32 %v491, %v500
    %v503 = vmul.f32 %v501, 1.442695
    %v504 = vpow.pop %v503
    %v505 = vmul.f32 %v502, 1.442695
    %v506 = vpow.pop %v505
    %v507 = vsel %vm494, %v504, 0.0
    %508 = vadd.xlane.f32.xlu0 %v507
    %v509 = vpop.xlane.xlu0 %508
    %v510 = vsel %vm494, %v506, 0.0
    %511 = vadd.xlane.f32.xlu0 %v510
    %v512 = vpop.xlane.xlu0 %511
    %v513 = vmul.f32 %v509, 5.656854
    %v514 = vmul.f32 %v512, 5.656854
    %v515 = vrcp.pop %v513
    %v516 = vrcp.pop %v514
    %v517 = vmul.f32 %v504, %v515
    %v518 = vmul.f32 %v506, %v516
    %v520 = vsel %vm494, %v517, 0
    %522 = vmatprep.subr.mxu0 0.0
    %523 = vmatpush1.msra.mxu0 0.0
    %524 = vmatprep.subr.mxu0 0.0
    %525 = vmatpush1.msra.mxu0 0.0
    %526 = vmatprep.subr.mxu0 0.0
    %527 = vmatpush1.msra.mxu0 0.0
    %528 = vmatprep.subr.mxu0 0.0
    %529 = vmatpush1.msra.mxu0 0.0
    %530 = vmatprep.subr.mxu0 0.0
    %531 = vmatpush1.msra.mxu0 0.0
    %532 = vmatprep.subr.mxu0 0.0
    %533 = vmatpush1.msra.mxu0 0.0
    %534 = vmatprep.subr.mxu0 0.0
    %535 = vmatpush1.msra.mxu0 0.0
    %536 = vmatprep.subr.mxu0 0.0
    %537 = vmatpush1.msra.mxu0 0.0
    %538 = vmatprep.subr.mxu0 0.0
    %539 = vmatpush1.msra.mxu0 0.0
    %540 = vmatprep.subr.mxu0 0.0
    %541 = vmatpush1.msra.mxu0 0.0
    %542 = vmatprep.subr.mxu0 0.0
    %543 = vmatpush1.msra.mxu0 0.0
    %544 = vmatprep.subr.mxu0 0.0
    %545 = vmatpush1.msra.mxu0 0.0
    %546 = vmatprep.subr.mxu0 0.0
    %547 = vmatpush1.msra.mxu0 0.0
    %548 = vmatprep.subr.mxu0 0.0
    %549 = vmatpush1.msra.mxu0 0.0
    %550 = vmatprep.subr.mxu0 0.0
    %551 = vmatpush1.msra.mxu0 0.0
    %552 = vmatprep.subr.mxu0 0.0
    %553 = vmatpush1.msra.mxu0 %v196
    %554 = vmatprep.subr.mxu0 0.0
    %555 = vmatpush2.msra.mxu0 0.0
    %556 = vmatprep.subr.mxu0 0.0
    %557 = vmatpush2.msra.mxu0 0.0
    %558 = vmatprep.subr.mxu0 0.0
    %559 = vmatpush2.msra.mxu0 0.0
    %560 = vmatprep.subr.mxu0 0.0
    %561 = vmatpush2.msra.mxu0 0.0
    %562 = vmatprep.subr.mxu0 0.0
    %563 = vmatpush2.msra.mxu0 0.0
    %564 = vmatprep.subr.mxu0 0.0
    %565 = vmatpush2.msra.mxu0 0.0
    %566 = vmatprep.subr.mxu0 0.0
    %567 = vmatpush2.msra.mxu0 0.0
    %568 = vmatprep.subr.mxu0 0.0
    %569 = vmatpush2.msra.mxu0 0.0
    %570 = vmatprep.subr.mxu0 0.0
    %571 = vmatpush2.msra.mxu0 0.0
    %572 = vmatprep.subr.mxu0 0.0
    %573 = vmatpush2.msra.mxu0 0.0
    %574 = vmatprep.subr.mxu0 0.0
    %575 = vmatpush2.msra.mxu0 0.0
    %576 = vmatprep.subr.mxu0 0.0
    %577 = vmatpush2.msra.mxu0 0.0
    %578 = vmatprep.subr.mxu0 0.0
    %579 = vmatpush2.msra.mxu0 0.0
    %580 = vmatprep.subr.mxu0 0.0
    %581 = vmatpush2.msra.mxu0 0.0
    %582 = vmatprep.subr.mxu0 0.0
    %583 = vmatpush2.msra.mxu0 0.0
    %584 = vmatprep.subr.mxu0 0.0
    %585 = vmatpush2.msra.mxu0 0.0
    %586 = vmatprep.mubr.f32.mxu0 0.0
    %587 = vmatmul.mubr.f32.gmra.mxu0 %v520
    %v588 = vpop.f32.mrf.mxu0
    %v589 = vadd.f32 0.0, %v588
    %v590 = vpop.f32.mrf.mxu0
    %591 = vdwg.mxu0
    %v593 = vsel %vm494, %v518, 0
    %595 = vmatprep.subr.mxu0 0.0
    %596 = vmatpush1.msra.mxu0 0.0
    %597 = vmatprep.subr.mxu0 0.0
    %598 = vmatpush1.msra.mxu0 0.0
    %599 = vmatprep.subr.mxu0 0.0
    %600 = vmatpush1.msra.mxu0 0.0
    %601 = vmatprep.subr.mxu0 0.0
    %602 = vmatpush1.msra.mxu0 0.0
    %603 = vmatprep.subr.mxu0 0.0
    %604 = vmatpush1.msra.mxu0 0.0
    %605 = vmatprep.subr.mxu0 0.0
    %606 = vmatpush1.msra.mxu0 0.0
    %607 = vmatprep.subr.mxu0 0.0
    %608 = vmatpush1.msra.mxu0 0.0
    %609 = vmatprep.subr.mxu0 0.0
    %610 = vmatpush1.msra.mxu0 0.0
    %611 = vmatprep.subr.mxu0 0.0
    %612 = vmatpush1.msra.mxu0 0.0
    %613 = vmatprep.subr.mxu0 0.0
    %614 = vmatpush1.msra.mxu0 0.0
    %615 = vmatprep.subr.mxu0 0.0
    %616 = vmatpush1.msra.mxu0 0.0
    %617 = vmatprep.subr.mxu0 0.0
    %618 = vmatpush1.msra.mxu0 0.0
    %619 = vmatprep.subr.mxu0 0.0
    %620 = vmatpush1.msra.mxu0 0.0
    %621 = vmatprep.subr.mxu0 0.0
    %622 = vmatpush1.msra.mxu0 0.0
    %623 = vmatprep.subr.mxu0 0.0
    %624 = vmatpush1.msra.mxu0 0.0
    %625 = vmatprep.subr.mxu0 0.0
    %626 = vmatpush1.msra.mxu0 %v201
    %627 = vmatprep.subr.mxu0 0.0
    %628 = vmatpush2.msra.mxu0 0.0
    %629 = vmatprep.subr.mxu0 0.0
    %630 = vmatpush2.msra.mxu0 0.0
    %631 = vmatprep.subr.mxu0 0.0
    %632 = vmatpush2.msra.mxu0 0.0
    %633 = vmatprep.subr.mxu0 0.0
    %634 = vmatpush2.msra.mxu0 0.0
    %635 = vmatprep.subr.mxu0 0.0
    %636 = vmatpush2.msra.mxu0 0.0
    %637 = vmatprep.subr.mxu0 0.0
    %638 = vmatpush2.msra.mxu0 0.0
    %639 = vmatprep.subr.mxu0 0.0
    %640 = vmatpush2.msra.mxu0 0.0
    %641 = vmatprep.subr.mxu0 0.0
    %642 = vmatpush2.msra.mxu0 0.0
    %643 = vmatprep.subr.mxu0 0.0
    %644 = vmatpush2.msra.mxu0 0.0
    %645 = vmatprep.subr.mxu0 0.0
    %646 = vmatpush2.msra.mxu0 0.0
    %647 = vmatprep.subr.mxu0 0.0
    %648 = vmatpush2.msra.mxu0 0.0
    %649 = vmatprep.subr.mxu0 0.0
    %650 = vmatpush2.msra.mxu0 0.0
    %651 = vmatprep.subr.mxu0 0.0
    %652 = vmatpush2.msra.mxu0 0.0
    %653 = vmatprep.subr.mxu0 0.0
    %654 = vmatpush2.msra.mxu0 0.0
    %655 = vmatprep.subr.mxu0 0.0
    %656 = vmatpush2.msra.mxu0 0.0
    %657 = vmatprep.subr.mxu0 0.0
    %658 = vmatpush2.msra.mxu0 0.0
    %659 = vmatprep.mubr.f32.mxu0 0.0
    %660 = vmatmul.mubr.f32.gmra.mxu0 %v593
    %v661 = vpop.f32.mrf.mxu0
    %v662 = vadd.f32 0.0, %v661
    %v663 = vpop.f32.mrf.mxu0
    %664 = vdwg.mxu0
    %665 = vst [vmem:[#allocation10] sm:$0xff] %v589
    %666 = vst [vmem:[#allocation10 + $0x8] sm:$0xff] %v662
    // Predicated region
    $region34: #{tpu_custom_call.1} parent=1 // pred_check
      _
    $region35: #{tpu_custom_call.1} parent=1 // pred_check_branch
      %668 = sbr.rel (0) target = $region37
    $region36: #{tpu_custom_call.1} parent=1 // pred_region
      %s670 = ssub.s32 256, 256
      %671 = vsyncadd [#allocation4], %s670
      %s672 = sshll.u32 [#allocation10], 4
      %s673 = int_to_ptr.vmem [resolvable:$true] %s672
      %678 = dma.vmem_to_hbm [thread:$0]  %s673, 256, %s4, [#allocation4], 128, 128, 8
    $region37: #{tpu_custom_call.1} parent=1 // pred_fallthru
      _
    // Predicated region
    $region38: #{tpu_custom_call.1} parent=1 // pred_check
      _
    $region39: #{tpu_custom_call.1} parent=1 // pred_check_branch
      %680 = sbr.rel (0) target = $region41
    $region40: #{tpu_custom_call.1} parent=1 // pred_region
      %681 = dma.done [#allocation4], 256
    $region41: #{tpu_custom_call.1} parent=1 // pred_fallthru
      _
    %682 = vsyncpa [#allocation3], 1
    %683 = vsyncpa [#allocation6], 1
    %684 = vsyncpa [#allocation9], 1
    %685 = vsyncpa [#allocation4], 1

// kernel: tpu_custom_call.1
$region0: #{tpu_custom_call.1}
  #allocation0 [shape = 'u32[]', space=smem, size = 0x4, offset = 0x4, fixed_abs, tag = 'smem constant byte address 0x4 - core index']
  #allocation1 [shape = 'u32[144,128]{1,0:T(1,128)}', space=vmem, size = 0x12000, scoped, tag = 'internal scratch']
  %s0 = inlined_call_operand.hbm [shape: f32[3,128,128], index: 0, kind: input, shape index: {}]
  %s1 = inlined_call_operand.hbm [shape: f32[2,8,128], index: 1, kind: input, shape index: {}]
  %s2 = inlined_call_operand.hbm [shape: f32[2,8,128], index: 2, kind: input, shape index: {}]
  %s3 = inlined_call_operand.hbm [shape: f32[2,8,128], index: 3, kind: input, shape index: {}]
  %s4 = inlined_call_operand.hbm [shape: f32[2,8,128], index: 4, kind: output, shape index: {}]
  %s5 = sld [smem:[#allocation0]]
  $region42: #{tpu_custom_call.1} parent=0
    _
  %s7 = ssub.s32 1, %s5
  %s8 = scalar_select 0, %s7, %s5
  $region1: #{tpu_custom_call.1} parent=0
    #allocation2 [shape = 'u8[196608]{0}', space=vmem, size = 0x30000, scoped, tag = 'input window, operand 0, single buffered']
    #allocation3 [shape = 's32[1]{0}', space=sflag, size = 0x4, scoped, tag = 'scoped memory for tpu_custom_call.1']
    #allocation4 [shape = 's32[1]{0}', space=sflag, size = 0x4, scoped, tag = 'scoped memory for tpu_custom_call.1']
    #allocation5 [shape = 'u8[8192]{0}', space=vmem, size = 0x2000, scoped, tag = 'input window, operand 1, single buffered']
    #allocation6 [shape = 's32[1]{0}', space=sflag, size = 0x4, scoped, tag = 'scoped memory for tpu_custom_call.1']
    #allocation7 [shape = 'u8[8192]{0}', space=vmem, size = 0x2000, scoped, tag = 'input window, operand 2, single buffered']
    #allocation8 [shape = 'u8[8192]{0}', space=vmem, size = 0x2000, scoped, tag = 'input window, operand 3, single buffered']
    #allocation9 [shape = 's32[1]{0}', space=sflag, size = 0x4, scoped, tag = 'scoped memory for tpu_custom_call.1']
    #allocation10 [shape = 'u8[8192]{0}', space=vmem, size = 0x2000, scoped, tag = 'output window, operand 0, single buffered']
    %9 = vsyncpa [#allocation3], 0
    %10 = vsyncpa [#allocation6], 0
    %11 = vsyncpa [#allocation9], 0
    %12 = vsyncpa [#allocation4], 0
    // Predicated region
    $region2: #{tpu_custom_call.1} parent=1 // pred_check
      _
    $region3: #{tpu_custom_call.1} parent=1 // pred_check_branch
      %14 = sbr.rel (0) target = $region5
    $region4: #{tpu_custom_call.1} parent=1 // pred_region
      %s16 = ssub.s32 6144, 6144
      %17 = vsyncadd [#allocation3], %s16
      %s18 = sshll.u32 [#allocation2], 4
      %s19 = int_to_ptr.vmem [resolvable:$true] %s18
      %24 = dma.hbm_to_vmem [thread:$0]  %s0, 6144, %s19, [#allocation3], 128, 128, 8
    $region5: #{tpu_custom_call.1} parent=1 // pred_fallthru
      _
    // Predicated region
    $region6: #{tpu_custom_call.1} parent=1 // pred_check
      _
    $region7: #{tpu_custom_call.1} parent=1 // pred_check_branch
      %26 = sbr.rel (0) target = $region9
    $region8: #{tpu_custom_call.1} parent=1 // pred_region
      %s28 = ssub.s32 256, 256
      %29 = vsyncadd [#allocation6], %s28
      %s30 = sshll.u32 [#allocation5], 4
      %s31 = int_to_ptr.vmem [resolvable:$true] %s30
      %36 = dma.hbm_to_vmem [thread:$0]  %s1, 256, %s31, [#allocation6], 128, 128, 8
    $region9: #{tpu_custom_call.1} parent=1 // pred_fallthru
      _
    // Predicated region
    $region10: #{tpu_custom_call.1} parent=1 // pred_check
      _
    $region11: #{tpu_custom_call.1} parent=1 // pred_check_branch
      %38 = sbr.rel (0) target = $region13
    $region12: #{tpu_custom_call.1} parent=1 // pred_region
      %s40 = ssub.s32 256, 256
      %41 = vsyncadd [#allocation6], %s40
      %s42 = sshll.u32 [#allocation7], 4
      %s43 = int_to_ptr.vmem [resolvable:$true] %s42
      %48 = dma.hbm_to_vmem [thread:$0]  %s2, 256, %s43, [#allocation6], 128, 128, 8
    $region13: #{tpu_custom_call.1} parent=1 // pred_fallthru
      _
    // Predicated region
    $region14: #{tpu_custom_call.1} parent=1 // pred_check
      _
    $region15: #{tpu_custom_call.1} parent=1 // pred_check_branch
      %50 = sbr.rel (0) target = $region17
    $region16: #{tpu_custom_call.1} parent=1 // pred_region
      %s52 = ssub.s32 256, 256
      %53 = vsyncadd [#allocation9], %s52
      %s54 = sshll.u32 [#allocation8], 4
      %s55 = int_to_ptr.vmem [resolvable:$true] %s54
      %60 = dma.hbm_to_vmem [thread:$0]  %s3, 256, %s55, [#allocation9], 128, 128, 8
    $region17: #{tpu_custom_call.1} parent=1 // pred_fallthru
      _
    // Predicated region
    $region18: #{tpu_custom_call.1} parent=1 // pred_check
      _
    $region19: #{tpu_custom_call.1} parent=1 // pred_check_branch
      %62 = sbr.rel (0) target = $region21
    $region20: #{tpu_custom_call.1} parent=1 // pred_region
      %63 = dma.done [#allocation3], 6144
    $region21: #{tpu_custom_call.1} parent=1 // pred_fallthru
      _
    // Predicated region
    $region22: #{tpu_custom_call.1} parent=1 // pred_check
      _
    $region23: #{tpu_custom_call.1} parent=1 // pred_check_branch
      %65 = sbr.rel (0) target = $region25
    $region24: #{tpu_custom_call.1} parent=1 // pred_region
      %66 = dma.done [#allocation6], 256
    $region25: #{tpu_custom_call.1} parent=1 // pred_fallthru
      _
    // Predicated region
    $region26: #{tpu_custom_call.1} parent=1 // pred_check
      _
    $region27: #{tpu_custom_call.1} parent=1 // pred_check_branch
      %68 = sbr.rel (0) target = $region29
    $region28: #{tpu_custom_call.1} parent=1 // pred_region
      %69 = dma.done [#allocation6], 256
    $region29: #{tpu_custom_call.1} parent=1 // pred_fallthru
      _
    // Predicated region
    $region30: #{tpu_custom_call.1} parent=1 // pred_check
      _
    $region31: #{tpu_custom_call.1} parent=1 // pred_check_branch
      %71 = sbr.rel (0) target = $region33
    $region32: #{tpu_custom_call.1} parent=1 // pred_region
      %72 = dma.done [#allocation9], 256
    $region33: #{tpu_custom_call.1} parent=1 // pred_fallthru
      _
    %v73 = vld [vmem:[#allocation2] sm:$0xff]
    %v74 = vld [vmem:[#allocation2 + $0x8] sm:$0xff]
    %v75 = vld [vmem:[#allocation2 + $0x10] sm:$0xff]
    %v76 = vld [vmem:[#allocation2 + $0x18] sm:$0xff]
    %v77 = vld [vmem:[#allocation2 + $0x20] sm:$0xff]
    %v78 = vld [vmem:[#allocation2 + $0x28] sm:$0xff]
    %v79 = vld [vmem:[#allocation2 + $0x30] sm:$0xff]
    %v80 = vld [vmem:[#allocation2 + $0x38] sm:$0xff]
    %v81 = vld [vmem:[#allocation2 + $0x40] sm:$0xff]
    %v82 = vld [vmem:[#allocation2 + $0x48] sm:$0xff]
    %v83 = vld [vmem:[#allocation2 + $0x50] sm:$0xff]
    %v84 = vld [vmem:[#allocation2 + $0x58] sm:$0xff]
    %v85 = vld [vmem:[#allocation2 + $0x60] sm:$0xff]
    %v86 = vld [vmem:[#allocation2 + $0x68] sm:$0xff]
    %v87 = vld [vmem:[#allocation2 + $0x70] sm:$0xff]
    %v88 = vld [vmem:[#allocation2 + $0x78] sm:$0xff]
    %s89 = scalar_lea.vmem [#allocation2], 128
    %v90 = vld [vmem:[%s89] sm:$0xff]
    %v91 = vld [vmem:[%s89 + $0x8] sm:$0xff]
    %v92 = vld [vmem:[%s89 + $0x10] sm:$0xff]
    %v93 = vld [vmem:[%s89 + $0x18] sm:$0xff]
    %v94 = vld [vmem:[%s89 + $0x20] sm:$0xff]
    %v95 = vld [vmem:[%s89 + $0x28] sm:$0xff]
    %v96 = vld [vmem:[%s89 + $0x30] sm:$0xff]
    %v97 = vld [vmem:[%s89 + $0x38] sm:$0xff]
    %v98 = vld [vmem:[%s89 + $0x40] sm:$0xff]
    %v99 = vld [vmem:[%s89 + $0x48] sm:$0xff]
    %v100 = vld [vmem:[%s89 + $0x50] sm:$0xff]
    %v101 = vld [vmem:[%s89 + $0x58] sm:$0xff]
    %v102 = vld [vmem:[%s89 + $0x60] sm:$0xff]
    %v103 = vld [vmem:[%s89 + $0x68] sm:$0xff]
    %v104 = vld [vmem:[%s89 + $0x70] sm:$0xff]
    %v105 = vld [vmem:[%s89 + $0x78] sm:$0xff]
    %s106 = scalar_lea.vmem [#allocation2], 256
    %v107 = vld [vmem:[%s106] sm:$0xff]
    %v108 = vld [vmem:[%s106 + $0x8] sm:$0xff]
    %v109 = vld [vmem:[%s106 + $0x10] sm:$0xff]
    %v110 = vld [vmem:[%s106 + $0x18] sm:$0xff]
    %v111 = vld [vmem:[%s106 + $0x20] sm:$0xff]
    %v112 = vld [vmem:[%s106 + $0x28] sm:$0xff]
    %v113 = vld [vmem:[%s106 + $0x30] sm:$0xff]
    %v114 = vld [vmem:[%s106 + $0x38] sm:$0xff]
    %v115 = vld [vmem:[%s106 + $0x40] sm:$0xff]
    %v116 = vld [vmem:[%s106 + $0x48] sm:$0xff]
    %v117 = vld [vmem:[%s106 + $0x50] sm:$0xff]
    %v118 = vld [vmem:[%s106 + $0x58] sm:$0xff]
    %v119 = vld [vmem:[%s106 + $0x60] sm:$0xff]
    %v120 = vld [vmem:[%s106 + $0x68] sm:$0xff]
    %v121 = vld [vmem:[%s106 + $0x70] sm:$0xff]
    %v122 = vld [vmem:[%s106 + $0x78] sm:$0xff]
    %v123 = vld [vmem:[#allocation5] sm:$0xff]
    %v124 = vld [vmem:[#allocation5 + $0x8] sm:$0xff]
    %v125 = vld [vmem:[#allocation7] sm:$0xff]
    %v126 = vld [vmem:[#allocation7 + $0x8] sm:$0xff]
    %v127 = vld [vmem:[#allocation8] sm:$0xff]
    %v128 = vld [vmem:[#allocation8 + $0x8] sm:$0xff]
    %129 = vmatprep.subr.mxu0 0.0
    %130 = vmatpush1.msra.mxu0 %v88
    %131 = vmatprep.subr.mxu0 0.0
    %132 = vmatpush1.msra.mxu0 %v87
    %133 = vmatprep.subr.mxu0 0.0
    %134 = vmatpush1.msra.mxu0 %v86
    %135 = vmatprep.subr.mxu0 0.0
    %136 = vmatpush1.msra.mxu0 %v85
    %137 = vmatprep.subr.mxu0 0.0
    %138 = vmatpush1.msra.mxu0 %v84
    %139 = vmatprep.subr.mxu0 0.0
    %140 = vmatpush1.msra.mxu0 %v83
    %141 = vmatprep.subr.mxu0 0.0
    %142 = vmatpush1.msra.mxu0 %v82
    %143 = vmatprep.subr.mxu0 0.0
    %144 = vmatpush1.msra.mxu0 %v81
    %145 = vmatprep.subr.mxu0 0.0
    %146 = vmatpush1.msra.mxu0 %v80
    %147 = vmatprep.subr.mxu0 0.0
    %148 = vmatpush1.msra.mxu0 %v79
    %149 = vmatprep.subr.mxu0 0.0
    %150 = vmatpush1.msra.mxu0 %v78
    %151 = vmatprep.subr.mxu0 0.0
    %152 = vmatpush1.msra.mxu0 %v77
    %153 = vmatprep.subr.mxu0 0.0
    %154 = vmatpush1.msra.mxu0 %v76
    %155 = vmatprep.subr.mxu0 0.0
    %156 = vmatpush1.msra.mxu0 %v75
    %157 = vmatprep.subr.mxu0 0.0
    %158 = vmatpush1.msra.mxu0 %v74
    %159 = vmatprep.subr.mxu0 0.0
    %160 = vmatpush1.msra.mxu0 %v73
    %161 = vmatprep.subr.mxu0 0.0
    %162 = vmatpush2.msra.mxu0 0.0
    %163 = vmatprep.subr.mxu0 0.0
    %164 = vmatpush2.msra.mxu0 0.0
    %165 = vmatprep.subr.mxu0 0.0
    %166 = vmatpush2.msra.mxu0 0.0
    %167 = vmatprep.subr.mxu0 0.0
    %168 = vmatpush2.msra.mxu0 0.0
    %169 = vmatprep.subr.mxu0 0.0
    %170 = vmatpush2.msra.mxu0 0.0
    %171 = vmatprep.subr.mxu0 0.0
    %172 = vmatpush2.msra.mxu0 0.0
    %173 = vmatprep.subr.mxu0 0.0
    %174 = vmatpush2.msra.mxu0 0.0
    %175 = vmatprep.subr.mxu0 0.0
    %176 = vmatpush2.msra.mxu0 0.0
    %177 = vmatprep.subr.mxu0 0.0
    %178 = vmatpush2.msra.mxu0 0.0
    %179 = vmatprep.subr.mxu0 0.0
    %180 = vmatpush2.msra.mxu0 0.0
    %181 = vmatprep.subr.mxu0 0.0
    %182 = vmatpush2.msra.mxu0 0.0
    %183 = vmatprep.subr.mxu0 0.0
    %184 = vmatpush2.msra.mxu0 0.0
    %185 = vmatprep.subr.mxu0 0.0
    %186 = vmatpush2.msra.mxu0 0.0
    %187 = vmatprep.subr.mxu0 0.0
    %188 = vmatpush2.msra.mxu0 0.0
    %189 = vmatprep.subr.mxu0 0.0
    %190 = vmatpush2.msra.mxu0 0.0
    %191 = vmatprep.subr.mxu0 0.0
    %192 = vmatpush2.msra.mxu0 0.0
    %193 = vmatprep.mubr.f32.mxu0 0.0
    %194 = vmatmul.mubr.f32.gmra.mxu0 %v123
    %v195 = vpop.f32.mrf.mxu0
    %v196 = vadd.f32 0.0, %v195
    %v197 = vpop.f32.mrf.mxu0
    %198 = vmatprep.mubr.f32.mxu0 0.0
    %199 = vmatmul.mubr.f32.gmra.mxu0 %v124
    %v200 = vpop.f32.mrf.mxu0
    %v201 = vadd.f32 0.0, %v200
    %v202 = vpop.f32.mrf.mxu0
    %203 = vdwg.mxu0
    %204 = vmatprep.subr.mxu0 0.0
    %205 = vmatpush1.msra.mxu0 %v105
    %206 = vmatprep.subr.mxu0 0.0
    %207 = vmatpush1.msra.mxu0 %v104
    %208 = vmatprep.subr.mxu0 0.0
    %209 = vmatpush1.msra.mxu0 %v103
    %210 = vmatprep.subr.mxu0 0.0
    %211 = vmatpush1.msra.mxu0 %v102
    %212 = vmatprep.subr.mxu0 0.0
    %213 = vmatpush1.msra.mxu0 %v101
    %214 = vmatprep.subr.mxu0 0.0
    %215 = vmatpush1.msra.mxu0 %v100
    %216 = vmatprep.subr.mxu0 0.0
    %217 = vmatpush1.msra.mxu0 %v99
    %218 = vmatprep.subr.mxu0 0.0
    %219 = vmatpush1.msra.mxu0 %v98
    %220 = vmatprep.subr.mxu0 0.0
    %221 = vmatpush1.msra.mxu0 %v97
    %222 = vmatprep.subr.mxu0 0.0
    %223 = vmatpush1.msra.mxu0 %v96
    %224 = vmatprep.subr.mxu0 0.0
    %225 = vmatpush1.msra.mxu0 %v95
    %226 = vmatprep.subr.mxu0 0.0
    %227 = vmatpush1.msra.mxu0 %v94
    %228 = vmatprep.subr.mxu0 0.0
    %229 = vmatpush1.msra.mxu0 %v93
    %230 = vmatprep.subr.mxu0 0.0
    %231 = vmatpush1.msra.mxu0 %v92
    %232 = vmatprep.subr.mxu0 0.0
    %233 = vmatpush1.msra.mxu0 %v91
    %234 = vmatprep.subr.mxu0 0.0
    %235 = vmatpush1.msra.mxu0 %v90
    %236 = vmatprep.subr.mxu0 0.0
    %237 = vmatpush2.msra.mxu0 0.0
    %238 = vmatprep.subr.mxu0 0.0
    %239 = vmatpush2.msra.mxu0 0.0
    %240 = vmatprep.subr.mxu0 0.0
    %241 = vmatpush2.msra.mxu0 0.0
    %242 = vmatprep.subr.mxu0 0.0
    %243 = vmatpush2.msra.mxu0 0.0
    %244 = vmatprep.subr.mxu0 0.0
    %245 = vmatpush2.msra.mxu0 0.0
    %246 = vmatprep.subr.mxu0 0.0
    %247 = vmatpush2.msra.mxu0 0.0
    %248 = vmatprep.subr.mxu0 0.0
    %249 = vmatpush2.msra.mxu0 0.0
    %250 = vmatprep.subr.mxu0 0.0
    %251 = vmatpush2.msra.mxu0 0.0
    %252 = vmatprep.subr.mxu0 0.0
    %253 = vmatpush2.msra.mxu0 0.0
    %254 = vmatprep.subr.mxu0 0.0
    %255 = vmatpush2.msra.mxu0 0.0
    %256 = vmatprep.subr.mxu0 0.0
    %257 = vmatpush2.msra.mxu0 0.0
    %258 = vmatprep.subr.mxu0 0.0
    %259 = vmatpush2.msra.mxu0 0.0
    %260 = vmatprep.subr.mxu0 0.0
    %261 = vmatpush2.msra.mxu0 0.0
    %262 = vmatprep.subr.mxu0 0.0
    %263 = vmatpush2.msra.mxu0 0.0
    %264 = vmatprep.subr.mxu0 0.0
    %265 = vmatpush2.msra.mxu0 0.0
    %266 = vmatprep.subr.mxu0 0.0
    %267 = vmatpush2.msra.mxu0 0.0
    %268 = vmatprep.mubr.f32.mxu0 0.0
    %269 = vmatmul.mubr.f32.gmra.mxu0 %v125
    %v270 = vpop.f32.mrf.mxu0
    %v271 = vadd.f32 0.0, %v270
    %v272 = vpop.f32.mrf.mxu0
    %273 = vmatprep.mubr.f32.mxu0 0.0
    %274 = vmatmul.mubr.f32.gmra.mxu0 %v126
    %v275 = vpop.f32.mrf.mxu0
    %v276 = vadd.f32 0.0, %v275
    %v277 = vpop.f32.mrf.mxu0
    %278 = vdwg.mxu0
    %279 = vmatprep.subr.mxu0 0.0
    %280 = vmatpush1.msra.mxu0 %v122
    %281 = vmatprep.subr.mxu0 0.0
    %282 = vmatpush1.msra.mxu0 %v121
    %283 = vmatprep.subr.mxu0 0.0
    %284 = vmatpush1.msra.mxu0 %v120
    %285 = vmatprep.subr.mxu0 0.0
    %286 = vmatpush1.msra.mxu0 %v119
    %287 = vmatprep.subr.mxu0 0.0
    %288 = vmatpush1.msra.mxu0 %v118
    %289 = vmatprep.subr.mxu0 0.0
    %290 = vmatpush1.msra.mxu0 %v117
    %291 = vmatprep.subr.mxu0 0.0
    %292 = vmatpush1.msra.mxu0 %v116
    %293 = vmatprep.subr.mxu0 0.0
    %294 = vmatpush1.msra.mxu0 %v115
    %295 = vmatprep.subr.mxu0 0.0
    %296 = vmatpush1.msra.mxu0 %v114
    %297 = vmatprep.subr.mxu0 0.0
    %298 = vmatpush1.msra.mxu0 %v113
    %299 = vmatprep.subr.mxu0 0.0
    %300 = vmatpush1.msra.mxu0 %v112
    %301 = vmatprep.subr.mxu0 0.0
    %302 = vmatpush1.msra.mxu0 %v111
    %303 = vmatprep.subr.mxu0 0.0
    %304 = vmatpush1.msra.mxu0 %v110
    %305 = vmatprep.subr.mxu0 0.0
    %306 = vmatpush1.msra.mxu0 %v109
    %307 = vmatprep.subr.mxu0 0.0
    %308 = vmatpush1.msra.mxu0 %v108
    %309 = vmatprep.subr.mxu0 0.0
    %310 = vmatpush1.msra.mxu0 %v107
    %311 = vmatprep.subr.mxu0 0.0
    %312 = vmatpush2.msra.mxu0 0.0
    %313 = vmatprep.subr.mxu0 0.0
    %314 = vmatpush2.msra.mxu0 0.0
    %315 = vmatprep.subr.mxu0 0.0
    %316 = vmatpush2.msra.mxu0 0.0
    %317 = vmatprep.subr.mxu0 0.0
    %318 = vmatpush2.msra.mxu0 0.0
    %319 = vmatprep.subr.mxu0 0.0
    %320 = vmatpush2.msra.mxu0 0.0
    %321 = vmatprep.subr.mxu0 0.0
    %322 = vmatpush2.msra.mxu0 0.0
    %323 = vmatprep.subr.mxu0 0.0
    %324 = vmatpush2.msra.mxu0 0.0
    %325 = vmatprep.subr.mxu0 0.0
    %326 = vmatpush2.msra.mxu0 0.0
    %327 = vmatprep.subr.mxu0 0.0
    %328 = vmatpush2.msra.mxu0 0.0
    %329 = vmatprep.subr.mxu0 0.0
    %330 = vmatpush2.msra.mxu0 0.0
    %331 = vmatprep.subr.mxu0 0.0
    %332 = vmatpush2.msra.mxu0 0.0
    %333 = vmatprep.subr.mxu0 0.0
    %334 = vmatpush2.msra.mxu0 0.0
    %335 = vmatprep.subr.mxu0 0.0
    %336 = vmatpush2.msra.mxu0 0.0
    %337 = vmatprep.subr.mxu0 0.0
    %338 = vmatpush2.msra.mxu0 0.0
    %339 = vmatprep.subr.mxu0 0.0
    %340 = vmatpush2.msra.mxu0 0.0
    %341 = vmatprep.subr.mxu0 0.0
    %342 = vmatpush2.msra.mxu0 0.0
    %343 = vmatprep.mubr.f32.mxu0 0.0
    %344 = vmatmul.mubr.f32.gmra.mxu0 %v127
    %v345 = vpop.f32.mrf.mxu0
    %v346 = vadd.f32 0.0, %v345
    %v347 = vpop.f32.mrf.mxu0
    %348 = vmatprep.mubr.f32.mxu0 0.0
    %349 = vmatmul.mubr.f32.gmra.mxu0 %v128
    %v350 = vpop.f32.mrf.mxu0
    %v351 = vadd.f32 0.0, %v350
    %v352 = vpop.f32.mrf.mxu0
    %353 = vdwg.mxu0
    %354 = vmatprep.subr.mxu0 0.0
    %355 = vmatpush1.xpose.msra.mxu0 0.0
    %356 = vmatprep.subr.mxu0 0.0
    %357 = vmatpush1.xpose.msra.mxu0 0.0
    %358 = vmatprep.subr.mxu0 0.0
    %359 = vmatpush1.xpose.msra.mxu0 0.0
    %360 = vmatprep.subr.mxu0 0.0
    %361 = vmatpush1.xpose.msra.mxu0 0.0
    %362 = vmatprep.subr.mxu0 0.0
    %363 = vmatpush1.xpose.msra.mxu0 0.0
    %364 = vmatprep.subr.mxu0 0.0
    %365 = vmatpush1.xpose.msra.mxu0 0.0
    %366 = vmatprep.subr.mxu0 0.0
    %367 = vmatpush1.xpose.msra.mxu0 0.0
    %368 = vmatprep.subr.mxu0 0.0
    %369 = vmatpush1.xpose.msra.mxu0 0.0
    %370 = vmatprep.subr.mxu0 0.0
    %371 = vmatpush1.xpose.msra.mxu0 0.0
    %372 = vmatprep.subr.mxu0 0.0
    %373 = vmatpush1.xpose.msra.mxu0 0.0
    %374 = vmatprep.subr.mxu0 0.0
    %375 = vmatpush1.xpose.msra.mxu0 0.0
    %376 = vmatprep.subr.mxu0 0.0
    %377 = vmatpush1.xpose.msra.mxu0 0.0
    %378 = vmatprep.subr.mxu0 0.0
    %379 = vmatpush1.xpose.msra.mxu0 0.0
    %380 = vmatprep.subr.mxu0 0.0
    %381 = vmatpush1.xpose.msra.mxu0 0.0
    %382 = vmatprep.subr.mxu0 0.0
    %383 = vmatpush1.xpose.msra.mxu0 0.0
    %384 = vmatprep.subr.mxu0 0.0
    %385 = vmatpush1.xpose.msra.mxu0 %v271
    %386 = vmatprep.subr.mxu0 0.0
    %387 = vmatpush2.xpose.msra.mxu0 0.0
    %388 = vmatprep.subr.mxu0 0.0
    %389 = vmatpush2.xpose.msra.mxu0 0.0
    %390 = vmatprep.subr.mxu0 0.0
    %391 = vmatpush2.xpose.msra.mxu0 0.0
    %392 = vmatprep.subr.mxu0 0.0
    %393 = vmatpush2.xpose.msra.mxu0 0.0
    %394 = vmatprep.subr.mxu0 0.0
    %395 = vmatpush2.xpose.msra.mxu0 0.0
    %396 = vmatprep.subr.mxu0 0.0
    %397 = vmatpush2.xpose.msra.mxu0 0.0
    %398 = vmatprep.subr.mxu0 0.0
    %399 = vmatpush2.xpose.msra.mxu0 0.0
    %400 = vmatprep.subr.mxu0 0.0
    %401 = vmatpush2.xpose.msra.mxu0 0.0
    %402 = vmatprep.subr.mxu0 0.0
    %403 = vmatpush2.xpose.msra.mxu0 0.0
    %404 = vmatprep.subr.mxu0 0.0
    %405 = vmatpush2.xpose.msra.mxu0 0.0
    %406 = vmatprep.subr.mxu0 0.0
    %407 = vmatpush2.xpose.msra.mxu0 0.0
    %408 = vmatprep.subr.mxu0 0.0
    %409 = vmatpush2.xpose.msra.mxu0 0.0
    %410 = vmatprep.subr.mxu0 0.0
    %411 = vmatpush2.xpose.msra.mxu0 0.0
    %412 = vmatprep.subr.mxu0 0.0
    %413 = vmatpush2.xpose.msra.mxu0 0.0
    %414 = vmatprep.subr.mxu0 0.0
    %415 = vmatpush2.xpose.msra.mxu0 0.0
    %416 = vmatprep.subr.mxu0 0.0
    %417 = vmatpush2.xpose.msra.mxu0 0.0
    %418 = vmatprep.mubr.f32.mxu0 0.0
    %419 = vmatmul.mubr.f32.gmra.mxu0 %v346
    %v420 = vpop.f32.mrf.mxu0
    %v421 = vadd.f32 0.0, %v420
    %v422 = vpop.f32.mrf.mxu0
    %423 = vdwg.mxu0
    %424 = vmatprep.subr.mxu0 0.0
    %425 = vmatpush1.xpose.msra.mxu0 0.0
    %426 = vmatprep.subr.mxu0 0.0
    %427 = vmatpush1.xpose.msra.mxu0 0.0
    %428 = vmatprep.subr.mxu0 0.0
    %429 = vmatpush1.xpose.msra.mxu0 0.0
    %430 = vmatprep.subr.mxu0 0.0
    %431 = vmatpush1.xpose.msra.mxu0 0.0
    %432 = vmatprep.subr.mxu0 0.0
    %433 = vmatpush1.xpose.msra.mxu0 0.0
    %434 = vmatprep.subr.mxu0 0.0
    %435 = vmatpush1.xpose.msra.mxu0 0.0
    %436 = vmatprep.subr.mxu0 0.0
    %437 = vmatpush1.xpose.msra.mxu0 0.0
    %438 = vmatprep.subr.mxu0 0.0
    %439 = vmatpush1.xpose.msra.mxu0 0.0
    %440 = vmatprep.subr.mxu0 0.0
    %441 = vmatpush1.xpose.msra.mxu0 0.0
    %442 = vmatprep.subr.mxu0 0.0
    %443 = vmatpush1.xpose.msra.mxu0 0.0
    %444 = vmatprep.subr.mxu0 0.0
    %445 = vmatpush1.xpose.msra.mxu0 0.0
    %446 = vmatprep.subr.mxu0 0.0
    %447 = vmatpush1.xpose.msra.mxu0 0.0
    %448 = vmatprep.subr.mxu0 0.0
    %449 = vmatpush1.xpose.msra.mxu0 0.0
    %450 = vmatprep.subr.mxu0 0.0
    %451 = vmatpush1.xpose.msra.mxu0 0.0
    %452 = vmatprep.subr.mxu0 0.0
    %453 = vmatpush1.xpose.msra.mxu0 0.0
    %454 = vmatprep.subr.mxu0 0.0
    %455 = vmatpush1.xpose.msra.mxu0 %v276
    %456 = vmatprep.subr.mxu0 0.0
    %457 = vmatpush2.xpose.msra.mxu0 0.0
    %458 = vmatprep.subr.mxu0 0.0
    %459 = vmatpush2.xpose.msra.mxu0 0.0
    %460 = vmatprep.subr.mxu0 0.0
    %461 = vmatpush2.xpose.msra.mxu0 0.0
    %462 = vmatprep.subr.mxu0 0.0
    %463 = vmatpush2.xpose.msra.mxu0 0.0
    %464 = vmatprep.subr.mxu0 0.0
    %465 = vmatpush2.xpose.msra.mxu0 0.0
    %466 = vmatprep.subr.mxu0 0.0
    %467 = vmatpush2.xpose.msra.mxu0 0.0
    %468 = vmatprep.subr.mxu0 0.0
    %469 = vmatpush2.xpose.msra.mxu0 0.0
    %470 = vmatprep.subr.mxu0 0.0
    %471 = vmatpush2.xpose.msra.mxu0 0.0
    %472 = vmatprep.subr.mxu0 0.0
    %473 = vmatpush2.xpose.msra.mxu0 0.0
    %474 = vmatprep.subr.mxu0 0.0
    %475 = vmatpush2.xpose.msra.mxu0 0.0
    %476 = vmatprep.subr.mxu0 0.0
    %477 = vmatpush2.xpose.msra.mxu0 0.0
    %478 = vmatprep.subr.mxu0 0.0
    %479 = vmatpush2.xpose.msra.mxu0 0.0
    %480 = vmatprep.subr.mxu0 0.0
    %481 = vmatpush2.xpose.msra.mxu0 0.0
    %482 = vmatprep.subr.mxu0 0.0
    %483 = vmatpush2.xpose.msra.mxu0 0.0
    %484 = vmatprep.subr.mxu0 0.0
    %485 = vmatpush2.xpose.msra.mxu0 0.0
    %486 = vmatprep.subr.mxu0 0.0
    %487 = vmatpush2.xpose.msra.mxu0 0.0
    %488 = vmatprep.mubr.f32.mxu0 0.0
    %489 = vmatmul.mubr.f32.gmra.mxu0 %v351
    %v490 = vpop.f32.mrf.mxu0
    %v491 = vadd.f32 0.0, %v490
    %v492 = vpop.f32.mrf.mxu0
    %493 = vdwg.mxu0
    %vm494 = vcmask 64512
    %v495 = vsel %vm494, %v421, -inf
    %496 = vmax.xlane.f32.xlu0 %v495
    %v497 = vpop.xlane.xlu0 %496
    %v498 = vsel %vm494, %v491, -inf
    %499 = vmax.xlane.f32.xlu0 %v498
    %v500 = vpop.xlane.xlu0 %499
    %v501 = vsub.f32 %v421, %v497
    %v502 = vsub.f32 %v491, %v500
    %v503 = vmul.f32 %v501, 1.442695
    %v504 = vpow.pop %v503
    %v505 = vmul.f32 %v502, 1.442695
    %v506 = vpow.pop %v505
    %v507 = vsel %vm494, %v504, 0.0
    %508 = vadd.xlane.f32.xlu0 %v507
    %v509 = vpop.xlane.xlu0 %508
    %v510 = vsel %vm494, %v506, 0.0
    %511 = vadd.xlane.f32.xlu0 %v510
    %v512 = vpop.xlane.xlu0 %511
    %v513 = vmul.f32 %v509, 5.656854
    %v514 = vmul.f32 %v512, 5.656854
    %v515 = vrcp.pop %v513
    %v516 = vrcp.pop %v514
    %v517 = vmul.f32 %v504, %v515
    %v518 = vmul.f32 %v506, %v516
    %v520 = vsel %vm494, %v517, 0
    %522 = vmatprep.subr.mxu0 0.0
    %523 = vmatpush1.msra.mxu0 0.0
    %524 = vmatprep.subr.mxu0 0.0
    %525 = vmatpush1.msra.mxu0 0.0
    %526 = vmatprep.subr.mxu0 0.0
    %527 = vmatpush1.msra.mxu0 0.0
    %528 = vmatprep.subr.mxu0 0.0
    %529 = vmatpush1.msra.mxu0 0.0
    %530 = vmatprep.subr.mxu0 0.0
    %531 = vmatpush1.msra.mxu0 0.0
    %532 = vmatprep.subr.mxu0 0.0
    %533 = vmatpush1.msra.mxu0 0.0
    %534 = vmatprep.subr.mxu0 0.0
    %535 = vmatpush1.msra.mxu0 0.0
    %536 = vmatprep.subr.mxu0 0.0
    %537 = vmatpush1.msra.mxu0 0.0
    %538 = vmatprep.subr.mxu0 0.0
    %539 = vmatpush1.msra.mxu0 0.0
    %540 = vmatprep.subr.mxu0 0.0
    %541 = vmatpush1.msra.mxu0 0.0
    %542 = vmatprep.subr.mxu0 0.0
    %543 = vmatpush1.msra.mxu0 0.0
    %544 = vmatprep.subr.mxu0 0.0
    %545 = vmatpush1.msra.mxu0 0.0
    %546 = vmatprep.subr.mxu0 0.0
    %547 = vmatpush1.msra.mxu0 0.0
    %548 = vmatprep.subr.mxu0 0.0
    %549 = vmatpush1.msra.mxu0 0.0
    %550 = vmatprep.subr.mxu0 0.0
    %551 = vmatpush1.msra.mxu0 0.0
    %552 = vmatprep.subr.mxu0 0.0
    %553 = vmatpush1.msra.mxu0 %v196
    %554 = vmatprep.subr.mxu0 0.0
    %555 = vmatpush2.msra.mxu0 0.0
    %556 = vmatprep.subr.mxu0 0.0
    %557 = vmatpush2.msra.mxu0 0.0
    %558 = vmatprep.subr.mxu0 0.0
    %559 = vmatpush2.msra.mxu0 0.0
    %560 = vmatprep.subr.mxu0 0.0
    %561 = vmatpush2.msra.mxu0 0.0
    %562 = vmatprep.subr.mxu0 0.0
    %563 = vmatpush2.msra.mxu0 0.0
    %564 = vmatprep.subr.mxu0 0.0
    %565 = vmatpush2.msra.mxu0 0.0
    %566 = vmatprep.subr.mxu0 0.0
    %567 = vmatpush2.msra.mxu0 0.0
    %568 = vmatprep.subr.mxu0 0.0
    %569 = vmatpush2.msra.mxu0 0.0
    %570 = vmatprep.subr.mxu0 0.0
    %571 = vmatpush2.msra.mxu0 0.0
    %572 = vmatprep.subr.mxu0 0.0
    %573 = vmatpush2.msra.mxu0 0.0
    %574 = vmatprep.subr.mxu0 0.0
    %575 = vmatpush2.msra.mxu0 0.0
    %576 = vmatprep.subr.mxu0 0.0
    %577 = vmatpush2.msra.mxu0 0.0
    %578 = vmatprep.subr.mxu0 0.0
    %579 = vmatpush2.msra.mxu0 0.0
    %580 = vmatprep.subr.mxu0 0.0
    %581 = vmatpush2.msra.mxu0 0.0
    %582 = vmatprep.subr.mxu0 0.0
    %583 = vmatpush2.msra.mxu0 0.0
    %584 = vmatprep.subr.mxu0 0.0
    %585 = vmatpush2.msra.mxu0 0.0
    %586 = vmatprep.mubr.f32.mxu0 0.0
    %587 = vmatmul.mubr.f32.gmra.mxu0 %v520
    %v588 = vpop.f32.mrf.mxu0
    %v589 = vadd.f32 0.0, %v588
    %v590 = vpop.f32.mrf.mxu0
    %591 = vdwg.mxu0
    %v593 = vsel %vm494, %v518, 0
    %595 = vmatprep.subr.mxu0 0.0
    %596 = vmatpush1.msra.mxu0 0.0
    %597 = vmatprep.subr.mxu0 0.0
    %598 = vmatpush1.msra.mxu0 0.0
    %599 = vmatprep.subr.mxu0 0.0
    %600 = vmatpush1.msra.mxu0 0.0
    %601 = vmatprep.subr.mxu0 0.0
    %602 = vmatpush1.msra.mxu0 0.0
    %603 = vmatprep.subr.mxu0 0.0
    %604 = vmatpush1.msra.mxu0 0.0
    %605 = vmatprep.subr.mxu0 0.0
    %606 = vmatpush1.msra.mxu0 0.0
    %607 = vmatprep.subr.mxu0 0.0
    %608 = vmatpush1.msra.mxu0 0.0
    %609 = vmatprep.subr.mxu0 0.0
    %610 = vmatpush1.msra.mxu0 0.0
    %611 = vmatprep.subr.mxu0 0.0
    %612 = vmatpush1.msra.mxu0 0.0
    %613 = vmatprep.subr.mxu0 0.0
    %614 = vmatpush1.msra.mxu0 0.0
    %615 = vmatprep.subr.mxu0 0.0
    %616 = vmatpush1.msra.mxu0 0.0
    %617 = vmatprep.subr.mxu0 0.0
    %618 = vmatpush1.msra.mxu0 0.0
    %619 = vmatprep.subr.mxu0 0.0
    %620 = vmatpush1.msra.mxu0 0.0
    %621 = vmatprep.subr.mxu0 0.0
    %622 = vmatpush1.msra.mxu0 0.0
    %623 = vmatprep.subr.mxu0 0.0
    %624 = vmatpush1.msra.mxu0 0.0
    %625 = vmatprep.subr.mxu0 0.0
    %626 = vmatpush1.msra.mxu0 %v201
    %627 = vmatprep.subr.mxu0 0.0
    %628 = vmatpush2.msra.mxu0 0.0
    %629 = vmatprep.subr.mxu0 0.0
    %630 = vmatpush2.msra.mxu0 0.0
    %631 = vmatprep.subr.mxu0 0.0
    %632 = vmatpush2.msra.mxu0 0.0
    %633 = vmatprep.subr.mxu0 0.0
    %634 = vmatpush2.msra.mxu0 0.0
    %635 = vmatprep.subr.mxu0 0.0
    %636 = vmatpush2.msra.mxu0 0.0
    %637 = vmatprep.subr.mxu0 0.0
    %638 = vmatpush2.msra.mxu0 0.0
    %639 = vmatprep.subr.mxu0 0.0
    %640 = vmatpush2.msra.mxu0 0.0
    %641 = vmatprep.subr.mxu0 0.0
    %642 = vmatpush2.msra.mxu0 0.0
    %643 = vmatprep.subr.mxu0 0.0
    %644 = vmatpush2.msra.mxu0 0.0
    %645 = vmatprep.subr.mxu0 0.0
    %646 = vmatpush2.msra.mxu0 0.0
    %647 = vmatprep.subr.mxu0 0.0
    %648 = vmatpush2.msra.mxu0 0.0
    %649 = vmatprep.subr.mxu0 0.0
    %650 = vmatpush2.msra.mxu0 0.0
    %651 = vmatprep.subr.mxu0 0.0
    %652 = vmatpush2.msra.mxu0 0.0
    %653 = vmatprep.subr.mxu0 0.0
    %654 = vmatpush2.msra.mxu0 0.0
    %655 = vmatprep.subr.mxu0 0.0
    %656 = vmatpush2.msra.mxu0 0.0
    %657 = vmatprep.subr.mxu0 0.0
    %658 = vmatpush2.msra.mxu0 0.0
    %659 = vmatprep.mubr.f32.mxu0 0.0
    %660 = vmatmul.mubr.f32.gmra.mxu0 %v593
    %v661 = vpop.f32.mrf.mxu0
    %v662 = vadd.f32 0.0, %v661
    %v663 = vpop.f32.mrf.mxu0
    %664 = vdwg.mxu0
    %665 = vst [vmem:[#allocation10] sm:$0xff] %v589
    %666 = vst [vmem:[#allocation10 + $0x8] sm:$0xff] %v662
    // Predicated region
    $region34: #{tpu_custom_call.1} parent=1 // pred_check
      _
    $region35: #{tpu_custom_call.1} parent=1 // pred_check_branch
      %668 = sbr.rel (0) target = $region37
    $region36: #{tpu_custom_call.1} parent=1 // pred_region
      %s670 = ssub.s32 256, 256
      %671 = vsyncadd [#allocation4], %s670
      %s672 = sshll.u32 [#allocation10], 4
      %s673 = int_to_ptr.vmem [resolvable:$true] %s672
      %678 = dma.vmem_to_hbm [thread:$0]  %s673, 256, %s4, [#allocation4], 128, 128, 8
    $region37: #{tpu_custom_call.1} parent=1 // pred_fallthru
      _
    // Predicated region
    $region38: #{tpu_custom_call.1} parent=1 // pred_check
      _
    $region39: #{tpu_custom_call.1} parent=1 // pred_check_branch
      %680 = sbr.rel (0) target = $region41
    $region40: #{tpu_custom_call.1} parent=1 // pred_region
      %681 = dma.done [#allocation4], 256
    $region41: #{tpu_custom_call.1} parent=1 // pred_fallthru
      _
    %682 = vsyncpa [#allocation3], 1
    %683 = vsyncpa [#allocation6], 1
    %684 = vsyncpa [#allocation9], 1
    %685 = vsyncpa [#allocation4], 1

</llo_original>
